<compile_context>
chip_gen: v7x
topology: tpu7x:2x2x1
jax: 0.10.0
libtpu: 0.0.40
codegen_flags: <defaults>
</compile_context>

<pallas_src>
import jax
import jax.numpy as jnp
from jax.experimental import pallas as pl
from jax.experimental.pallas import tpu as pltpu


def _round_up(x, m):
    return (x + m - 1) // m * m


def _pick_time_chunk(T, max_tt=32):
    """Largest divisor of T that is <= max_tt (timesteps per grid step)."""
    tt = 1
    for d in range(1, min(T, max_tt) + 1):
        if T % d == 0:
            tt = d
    return tt


def _pick_batch_tile(B_pad, cap=256):
    """Largest divisor of B_pad that is a multiple of 8 and <= cap."""
    best = 8
    d = 8
    while d <= min(B_pad, cap):
        if B_pad % d == 0:
            best = d
        d += 8
    # v7x: if there would be a single batch tile and the batch is big enough,
    # split it in two so both TensorCores get recurrence work.
    if B_pad // best == 1 and B_pad >= 64 and (B_pad // 2) % 8 == 0:
        best = B_pad // 2
    return best


# ---------------------------------------------------------------------------
# Fused LSTM recurrence kernel (+ fc on the final hidden state).
#   grid = (B_pad // B_TILE [parallel], T // TT [arbitrary / serial])
# ---------------------------------------------------------------------------
def lstm_fused_kernel(x_ref, wih_ref, whh_ref, b_ref, wfc_ref, bfc_ref,
                      out_ref, h_sc, c_sc):
    # x_ref:   [TT, B_TILE, E_pad] bf16   (this chunk of embedded timesteps)
    # wih_ref: [E_pad, 4*H_pad] bf16      whh_ref: [H_pad, 4*H_pad] bf16
    # b_ref:   [1, 4*H_pad] f32 (b_ih + b_hh, gate order i,f,o,g)
    # wfc_ref: [H_pad, C_pad] bf16        bfc_ref: [1, C_pad] f32
    # out_ref: [B_TILE, C_pad] f32
    # h_sc, c_sc: [B_TILE, H_pad] f32 scratch (persist across the time axis)
    t_chunk = pl.program_id(1)
    H = whh_ref.shape[0]            # padded hidden size (multiple of 128)
    TT = x_ref.shape[0]
    BT = x_ref.shape[1]

    @pl.when(t_chunk == 0)
    def _():
        h_sc[...] = jnp.zeros_like(h_sc)
        c_sc[...] = jnp.zeros_like(c_sc)

    # Hoist the bias broadcast out of the unrolled loop.
    bias = jnp.broadcast_to(b_ref[...], (BT, 4 * H))

    def step(t, carry):
        h, c = carry
        gates = (
            jnp.dot(x_ref[t], wih_ref[...],
                    preferred_element_type=jnp.float32)
            + jnp.dot(h.astype(whh_ref.dtype), whh_ref[...],
                      preferred_element_type=jnp.float32)
            + bias
        )
        # Kernel gate order is (i, f, o, g): the three sigmoids are one
        # contiguous lane-aligned slab, tanh is a single H_pad slice.
        sig = jax.nn.sigmoid(gates[:, 0:3 * H])
        i_g = sig[:, 0 * H:1 * H]
        f_g = sig[:, 1 * H:2 * H]
        o_g = sig[:, 2 * H:3 * H]
        g_g = jnp.tanh(gates[:, 3 * H:4 * H])
        c_new = f_g * c + i_g * g_g
        h_new = o_g * jnp.tanh(c_new)
        return h_new, c_new

    h, c = jax.lax.fori_loop(0, TT, step, (h_sc[...], c_sc[...]), unroll=True)
    h_sc[...] = h
    c_sc[...] = c

    @pl.when(t_chunk == pl.num_programs(1) - 1)
    def _():
        out_ref[...] = (
            jnp.dot(h.astype(wfc_ref.dtype), wfc_ref[...],
                    preferred_element_type=jnp.float32)
            + bfc_ref[...]
        )


# ------------------------------ JAX wrapper --------------------------------

def comments_classifier_forward(input_ids, kparams):
    """input_ids: [B, T] int32. Returns logits [B, num_classes] float32."""
    emb = kparams["embedding"]          # [vocab, E_pad] f32 (cols zero-padded)
    wih = kparams["w_ih"]               # [E_pad, 4*H_pad] bf16
    whh = kparams["w_hh"]               # [H_pad, 4*H_pad] bf16
    b_lstm = kparams["b_lstm"]          # [1, 4*H_pad] f32
    wfc = kparams["w_fc"]               # [H_pad, C_pad] bf16
    bfc = kparams["b_fc"]               # [1, C_pad] f32
    num_classes = kparams["num_classes"]

    B, T = input_ids.shape
    E_pad = emb.shape[1]
    H4 = wih.shape[1]                   # 4 * H_pad
    H_pad = whh.shape[0]
    C_pad = wfc.shape[1]

    # Batch padded to a sublane multiple only (no blow-up to 128 multiples).
    B_pad = _round_up(max(B, 8), 8)
    B_TILE = _pick_batch_tile(B_pad)
    TT = _pick_time_chunk(T)            # timesteps per grid step

    # Embedding lookup directly time-major; pad ids with token 0 (zero row).
    ids_tb = jnp.transpose(input_ids, (1, 0))                    # [T, B]
    if B_pad > B:
        ids_tb = jnp.pad(ids_tb, ((0, 0), (0, B_pad - B)))
    x_tbe = jnp.take(emb, ids_tb, axis=0).astype(jnp.bfloat16)   # [T, B_pad, E_pad]

    logits_pad = pl.pallas_call(
        lstm_fused_kernel,
        out_shape=jax.ShapeDtypeStruct((B_pad, C_pad), jnp.float32),
        grid_spec=pltpu.PrefetchScalarGridSpec(
            num_scalar_prefetch=0,
            grid=(B_pad // B_TILE, T // TT),     # (batch-parallel, time-serial)
            in_specs=[
                # streamed per time chunk
                pl.BlockSpec((TT, B_TILE, E_pad), lambda b, t: (t, b, 0)),
                # resident weights / biases (constant index maps)
                pl.BlockSpec((E_pad, H4), lambda b, t: (0, 0)),
                pl.BlockSpec((H_pad, H4), lambda b, t: (0, 0)),
                pl.BlockSpec((1, H4), lambda b, t: (0, 0)),
                pl.BlockSpec((H_pad, C_pad), lambda b, t: (0, 0)),
                pl.BlockSpec((1, C_pad), lambda b, t: (0, 0)),
            ],
            out_specs=pl.BlockSpec((B_TILE, C_pad), lambda b, t: (b, 0)),
            scratch_shapes=[
                pltpu.VMEM((B_TILE, H_pad), jnp.float32),   # h
                pltpu.VMEM((B_TILE, H_pad), jnp.float32),   # c
            ],
        ),
        compiler_params=pltpu.CompilerParams(
            dimension_semantics=("parallel", "arbitrary"),
            # 48 MiB fits under v7x's 64 MiB physical VMEM while leaving the
            # default 32 MiB cap behind on v5e/v6e (128 MiB physical).
            vmem_limit_bytes=48 * 1024 * 1024,
        ),
    )(x_tbe, wih, whh, b_lstm, wfc, bfc)

    return logits_pad[:B, :num_classes]


# ------------------------- deterministic param init -------------------------

def init_params(key, vocab_size, embedding_dim, hidden_size, num_classes):
    """PyTorch-layout parameters (Embedding / LSTM / Linear), f32."""
    keys = jax.random.split(key, 7)
    H = hidden_size
    bound = 1.0 / jnp.sqrt(jnp.float32(H))

    emb = jax.random.normal(keys[0], (vocab_size, embedding_dim), jnp.float32)
    emb = emb.at[0].set(0.0)                                 # padding_idx=0

    w_ih = jax.random.uniform(keys[1], (4 * H, embedding_dim), jnp.float32,
                              -bound, bound)
    w_hh = jax.random.uniform(keys[2], (4 * H, H), jnp.float32, -bound, bound)
    b_ih = jax.random.uniform(keys[3], (4 * H,), jnp.float32, -bound, bound)
    b_hh = jax.random.uniform(keys[4], (4 * H,), jnp.float32, -bound, bound)

    w_fc = jax.random.uniform(keys[5], (num_classes, H), jnp.float32,
                              -bound, bound)
    b_fc = jax.random.uniform(keys[6], (num_classes,), jnp.float32,
                              -bound, bound)

    return {"embedding": emb, "w_ih": w_ih, "w_hh": w_hh, "b_ih": b_ih,
            "b_hh": b_hh, "w_fc": w_fc, "b_fc": b_fc}


def prepare_kernel_params(p):
    """One-time transpose / lane-pad / gate-reorder / bf16-cast of weights."""
    E = p["embedding"].shape[1]
    H = p["w_hh"].shape[1]
    C = p["w_fc"].shape[0]
    E_pad = _round_up(E, 128)
    H_pad = _round_up(H, 128)
    C_pad = _round_up(C, 128)

    # PyTorch gate order (i, f, g, o)  ->  kernel order (i, f, o, g)
    gate_perm = jnp.array([0, 1, 3, 2], dtype=jnp.int32)

    def pad_gate_cols(w_t, in_pad):    # w_t: [in_dim, 4H] (gate blocks i,f,g,o)
        d = w_t.shape[0]
        w4 = w_t.reshape(d, 4, H)
        w4 = jnp.take(w4, gate_perm, axis=1)
        w4 = jnp.pad(w4, ((0, in_pad - d), (0, 0), (0, H_pad - H)))
        return w4.reshape(in_pad, 4 * H_pad)

    emb = jnp.pad(p["embedding"], ((0, 0), (0, E_pad - E)))     # [vocab, E_pad]

    w_ih_t = pad_gate_cols(p["w_ih"].T, E_pad)                  # [E_pad, 4H_pad]
    w_hh_t = pad_gate_cols(p["w_hh"].T, H_pad)                  # [H_pad, 4H_pad]

    b = (p["b_ih"] + p["b_hh"]).reshape(4, H)
    b = jnp.take(b, gate_perm, axis=0)
    b = jnp.pad(b, ((0, 0), (0, H_pad - H))).reshape(1, 4 * H_pad)

    w_fc_t = jnp.pad(p["w_fc"].T, ((0, H_pad - H), (0, C_pad - C)))
    b_fc = jnp.pad(p["b_fc"].reshape(1, C), ((0, 0), (0, C_pad - C)))

    return {
        "embedding": emb.astype(jnp.float32),
        "w_ih": w_ih_t.astype(jnp.bfloat16),
        "w_hh": w_hh_t.astype(jnp.bfloat16),
        "b_lstm": b.astype(jnp.float32),
        "w_fc": w_fc_t.astype(jnp.bfloat16),
        "b_fc": b_fc.astype(jnp.float32),
        "num_classes": C,
    }


# ----------------------- pure-JAX reference (f32) ---------------------------

def reference_forward(input_ids, p):
    emb = jnp.take(p["embedding"], input_ids, axis=0)          # [B, T, E]
    H = p["w_hh"].shape[1]
    B = emb.shape[0]
    w_ih_t, w_hh_t = p["w_ih"].T, p["w_hh"].T
    b = p["b_ih"] + p["b_hh"]

    def step(carry, x_t):
        h, c = carry
        g = x_t @ w_ih_t + h @ w_hh_t + b
        i = jax.nn.sigmoid(g[:, 0 * H:1 * H])
        f = jax.nn.sigmoid(g[:, 1 * H:2 * H])
        gg = jnp.tanh(g[:, 2 * H:3 * H])
        o = jax.nn.sigmoid(g[:, 3 * H:4 * H])
        c = f * c + i * gg
        h = o * jnp.tanh(c)
        return (h, c), None

    h0 = jnp.zeros((B, H), jnp.float32)
    c0 = jnp.zeros((B, H), jnp.float32)
    (h_last, _), _ = jax.lax.scan(step, (h0, c0),
                                  jnp.transpose(emb, (1, 0, 2)))
    return h_last @ p["w_fc"].T + p["b_fc"]


if __name__ == "__main__":
    vocab_size, embedding_dim, hidden_size, num_classes = 32, 16, 32, 4
    batch, seq = 2, 8

    key = jax.random.PRNGKey(0)
    k_params, k_ids = jax.random.split(key)
    params = init_params(k_params, vocab_size, embedding_dim, hidden_size,
                         num_classes)
    kparams = prepare_kernel_params(params)

    input_ids = jax.random.randint(k_ids, (batch, seq), 0, vocab_size,
                                   dtype=jnp.int32)
    # Mirrors the PyTorch assert on embedding range.
    assert int(input_ids.max()) < vocab_size

    logits = comments_classifier_forward(input_ids, kparams)
    logits = jax.block_until_ready(logits)
    assert logits.shape == (batch, num_classes)

    ref = reference_forward(input_ids, params)
    max_err = float(jnp.max(jnp.abs(logits - ref)))
    assert max_err < 5e-2, f"mismatch vs f32 reference: {max_err}"
    print("KERNEL_OK")
</pallas_src>

<mosaic_0001>
module attributes {stable_mosaic.version = 11 : i64} {
  func.func @lstm_fused_kernel(%arg0: i32, %arg1: i32, %arg2: memref<8x8x128xbf16, #tpu.memory_space<vmem>>, %arg3: memref<128x512xbf16, #tpu.memory_space<vmem>>, %arg4: memref<128x512xbf16, #tpu.memory_space<vmem>>, %arg5: memref<1x512xf32, #tpu.memory_space<vmem>>, %arg6: memref<128x128xbf16, #tpu.memory_space<vmem>>, %arg7: memref<1x128xf32, #tpu.memory_space<vmem>>, %arg8: memref<8x128xf32, #tpu.memory_space<vmem>>, %arg9: memref<8x128xf32, #tpu.memory_space<vmem>>, %arg10: memref<8x128xf32, #tpu.memory_space<vmem>>) attributes {dimension_semantics = [#tpu.dimension_semantics<parallel>, #tpu.dimension_semantics<arbitrary>], iteration_bounds = array<i64: 1, 1>, scalar_prefetch = 0 : i64, scratch_operands = 2 : i64, tpu.core_type = #tpu.core_type<tc>, window_params = [{transform_indices = @transform_0, window_bounds = array<i64: 8, 8, 128>}, {pipeline_mode = #tpu.pipeline_mode<synchronous>, transform_indices = @transform_1, window_bounds = array<i64: 128, 512>}, {pipeline_mode = #tpu.pipeline_mode<synchronous>, transform_indices = @transform_2, window_bounds = array<i64: 128, 512>}, {pipeline_mode = #tpu.pipeline_mode<synchronous>, transform_indices = @transform_3, window_bounds = array<i64: 1, 512>}, {pipeline_mode = #tpu.pipeline_mode<synchronous>, transform_indices = @transform_4, window_bounds = array<i64: 128, 128>}, {pipeline_mode = #tpu.pipeline_mode<synchronous>, transform_indices = @transform_5, window_bounds = array<i64: 1, 128>}, {transform_indices = @transform_6, window_bounds = array<i64: 8, 128>}]} {
    %c0_i32 = arith.constant 0 : i32
    %0 = arith.cmpi eq, %arg1, %c0_i32 : i32
    %1 = arith.extui %0 : i1 to i32
    %c0_i32_0 = arith.constant 0 : i32
    %2 = arith.cmpi ne, %1, %c0_i32_0 : i32
    scf.if %2 {
      %cst_84 = arith.constant 0.000000e+00 : f32
      %221 = vector.broadcast %cst_84 : f32 to vector<8x128xf32>
      %c0_85 = arith.constant 0 : index
      %c0_86 = arith.constant 0 : index
      %222 = vector.load %arg9[%c0_85, %c0_86] : memref<8x128xf32, #tpu.memory_space<vmem>>, vector<8x128xf32>
      tpu.vector_store %arg9[%c0_85, %c0_86], %221 {strides = array<i32>} : memref<8x128xf32, #tpu.memory_space<vmem>>, vector<8x128xf32>,
      %cst_87 = arith.constant 0.000000e+00 : f32
      %223 = vector.broadcast %cst_87 : f32 to vector<8x128xf32>
      %c0_88 = arith.constant 0 : index
      %c0_89 = arith.constant 0 : index
      %224 = vector.load %arg10[%c0_88, %c0_89] : memref<8x128xf32, #tpu.memory_space<vmem>>, vector<8x128xf32>
      tpu.vector_store %arg10[%c0_88, %c0_89], %223 {strides = array<i32>} : memref<8x128xf32, #tpu.memory_space<vmem>>, vector<8x128xf32>,
    } else {
    }
    %c0 = arith.constant 0 : index
    %c0_1 = arith.constant 0 : index
    %3 = vector.load %arg5[%c0, %c0_1] : memref<1x512xf32, #tpu.memory_space<vmem>>, vector<1x512xf32>
    %4 = vector.shape_cast %3 : vector<1x512xf32> to vector<1x512xf32>
    %5 = vector.broadcast %4 : vector<1x512xf32> to vector<8x512xf32>
    %c0_2 = arith.constant 0 : index
    %c0_3 = arith.constant 0 : index
    %6 = vector.load %arg9[%c0_2, %c0_3] : memref<8x128xf32, #tpu.memory_space<vmem>>, vector<8x128xf32>
    %c0_4 = arith.constant 0 : index
    %c0_5 = arith.constant 0 : index
    %7 = vector.load %arg10[%c0_4, %c0_5] : memref<8x128xf32, #tpu.memory_space<vmem>>, vector<8x128xf32>
    %c0_i32_6 = arith.constant 0 : i32
    %8 = arith.index_cast %c0_i32_6 : i32 to index
    %c0_7 = arith.constant 0 : index
    %c0_8 = arith.constant 0 : index
    %9 = vector.load %arg2[%8, %c0_7, %c0_8] : memref<8x8x128xbf16, #tpu.memory_space<vmem>>, vector<1x8x128xbf16>
    %10 = vector.shape_cast %9 : vector<1x8x128xbf16> to vector<8x128xbf16>
    %c0_9 = arith.constant 0 : index
    %c0_10 = arith.constant 0 : index
    %11 = vector.load %arg3[%c0_9, %c0_10] : memref<128x512xbf16, #tpu.memory_space<vmem>>, vector<128x512xbf16>
    %cst = arith.constant dense<0.000000e+00> : vector<8x512xf32>
    %12 = tpu.matmul %10, %11, %cst {dimension_numbers = #tpu.dot_dimension_numbers<[1], [0], [0], [1], [0, 0, 1, 1], [], []>} : vector<8x128xbf16>, vector<128x512xbf16>, vector<8x512xf32> -> vector<8x512xf32>
    %13 = arith.truncf %6 : vector<8x128xf32> to vector<8x128xbf16>
    %c0_11 = arith.constant 0 : index
    %c0_12 = arith.constant 0 : index
    %14 = vector.load %arg4[%c0_11, %c0_12] : memref<128x512xbf16, #tpu.memory_space<vmem>>, vector<128x512xbf16>
    %cst_13 = arith.constant dense<0.000000e+00> : vector<8x512xf32>
    %15 = tpu.matmul %13, %14, %cst_13 {dimension_numbers = #tpu.dot_dimension_numbers<[1], [0], [0], [1], [0, 0, 1, 1], [], []>} : vector<8x128xbf16>, vector<128x512xbf16>, vector<8x512xf32> -> vector<8x512xf32>
    %16 = arith.addf %12, %15 : vector<8x512xf32>
    %17 = arith.addf %16, %5 : vector<8x512xf32>
    %18 = vector.extract_strided_slice %17 {offsets = [0, 0], sizes = [8, 384], strides = [1, 1]} : vector<8x512xf32> to vector<8x384xf32>
    %19 = arith.negf %18 : vector<8x384xf32>
    %20 = math.exp %19 : vector<8x384xf32>
    %cst_14 = arith.constant 1.000000e+00 : f32
    %21 = vector.broadcast %cst_14 : f32 to vector<8x384xf32>
    %22 = arith.addf %21, %20 : vector<8x384xf32>
    %23 = arith.divf %21, %22 : vector<8x384xf32>
    %24 = vector.extract_strided_slice %23 {offsets = [0, 0], sizes = [8, 128], strides = [1, 1]} : vector<8x384xf32> to vector<8x128xf32>
    %25 = vector.extract_strided_slice %23 {offsets = [0, 128], sizes = [8, 128], strides = [1, 1]} : vector<8x384xf32> to vector<8x128xf32>
    %26 = vector.extract_strided_slice %23 {offsets = [0, 256], sizes = [8, 128], strides = [1, 1]} : vector<8x384xf32> to vector<8x128xf32>
    %27 = vector.extract_strided_slice %17 {offsets = [0, 384], sizes = [8, 128], strides = [1, 1]} : vector<8x512xf32> to vector<8x128xf32>
    %28 = math.tanh %27 : vector<8x128xf32>
    %29 = arith.mulf %25, %7 : vector<8x128xf32>
    %30 = arith.mulf %24, %28 : vector<8x128xf32>
    %31 = arith.addf %29, %30 : vector<8x128xf32>
    %32 = math.tanh %31 : vector<8x128xf32>
    %33 = arith.mulf %26, %32 : vector<8x128xf32>
    %c1_i32 = arith.constant 1 : i32
    %34 = arith.index_cast %c1_i32 : i32 to index
    %c0_15 = arith.constant 0 : index
    %c0_16 = arith.constant 0 : index
    %35 = vector.load %arg2[%34, %c0_15, %c0_16] : memref<8x8x128xbf16, #tpu.memory_space<vmem>>, vector<1x8x128xbf16>
    %36 = vector.shape_cast %35 : vector<1x8x128xbf16> to vector<8x128xbf16>
    %c0_17 = arith.constant 0 : index
    %c0_18 = arith.constant 0 : index
    %37 = vector.load %arg3[%c0_17, %c0_18] : memref<128x512xbf16, #tpu.memory_space<vmem>>, vector<128x512xbf16>
    %cst_19 = arith.constant dense<0.000000e+00> : vector<8x512xf32>
    %38 = tpu.matmul %36, %37, %cst_19 {dimension_numbers = #tpu.dot_dimension_numbers<[1], [0], [0], [1], [0, 0, 1, 1], [], []>} : vector<8x128xbf16>, vector<128x512xbf16>, vector<8x512xf32> -> vector<8x512xf32>
    %39 = arith.truncf %33 : vector<8x128xf32> to vector<8x128xbf16>
    %c0_20 = arith.constant 0 : index
    %c0_21 = arith.constant 0 : index
    %40 = vector.load %arg4[%c0_20, %c0_21] : memref<128x512xbf16, #tpu.memory_space<vmem>>, vector<128x512xbf16>
    %cst_22 = arith.constant dense<0.000000e+00> : vector<8x512xf32>
    %41 = tpu.matmul %39, %40, %cst_22 {dimension_numbers = #tpu.dot_dimension_numbers<[1], [0], [0], [1], [0, 0, 1, 1], [], []>} : vector<8x128xbf16>, vector<128x512xbf16>, vector<8x512xf32> -> vector<8x512xf32>
    %42 = arith.addf %38, %41 : vector<8x512xf32>
    %43 = arith.addf %42, %5 : vector<8x512xf32>
    %44 = vector.extract_strided_slice %43 {offsets = [0, 0], sizes = [8, 384], strides = [1, 1]} : vector<8x512xf32> to vector<8x384xf32>
    %45 = arith.negf %44 : vector<8x384xf32>
    %46 = math.exp %45 : vector<8x384xf32>
    %cst_23 = arith.constant 1.000000e+00 : f32
    %47 = vector.broadcast %cst_23 : f32 to vector<8x384xf32>
    %48 = arith.addf %47, %46 : vector<8x384xf32>
    %49 = arith.divf %47, %48 : vector<8x384xf32>
    %50 = vector.extract_strided_slice %49 {offsets = [0, 0], sizes = [8, 128], strides = [1, 1]} : vector<8x384xf32> to vector<8x128xf32>
    %51 = vector.extract_strided_slice %49 {offsets = [0, 128], sizes = [8, 128], strides = [1, 1]} : vector<8x384xf32> to vector<8x128xf32>
    %52 = vector.extract_strided_slice %49 {offsets = [0, 256], sizes = [8, 128], strides = [1, 1]} : vector<8x384xf32> to vector<8x128xf32>
    %53 = vector.extract_strided_slice %43 {offsets = [0, 384], sizes = [8, 128], strides = [1, 1]} : vector<8x512xf32> to vector<8x128xf32>
    %54 = math.tanh %53 : vector<8x128xf32>
    %55 = arith.mulf %51, %31 : vector<8x128xf32>
    %56 = arith.mulf %50, %54 : vector<8x128xf32>
    %57 = arith.addf %55, %56 : vector<8x128xf32>
    %58 = math.tanh %57 : vector<8x128xf32>
    %59 = arith.mulf %52, %58 : vector<8x128xf32>
    %c2_i32 = arith.constant 2 : i32
    %60 = arith.index_cast %c2_i32 : i32 to index
    %c0_24 = arith.constant 0 : index
    %c0_25 = arith.constant 0 : index
    %61 = vector.load %arg2[%60, %c0_24, %c0_25] : memref<8x8x128xbf16, #tpu.memory_space<vmem>>, vector<1x8x128xbf16>
    %62 = vector.shape_cast %61 : vector<1x8x128xbf16> to vector<8x128xbf16>
    %c0_26 = arith.constant 0 : index
    %c0_27 = arith.constant 0 : index
    %63 = vector.load %arg3[%c0_26, %c0_27] : memref<128x512xbf16, #tpu.memory_space<vmem>>, vector<128x512xbf16>
    %cst_28 = arith.constant dense<0.000000e+00> : vector<8x512xf32>
    %64 = tpu.matmul %62, %63, %cst_28 {dimension_numbers = #tpu.dot_dimension_numbers<[1], [0], [0], [1], [0, 0, 1, 1], [], []>} : vector<8x128xbf16>, vector<128x512xbf16>, vector<8x512xf32> -> vector<8x512xf32>
    %65 = arith.truncf %59 : vector<8x128xf32> to vector<8x128xbf16>
    %c0_29 = arith.constant 0 : index
    %c0_30 = arith.constant 0 : index
    %66 = vector.load %arg4[%c0_29, %c0_30] : memref<128x512xbf16, #tpu.memory_space<vmem>>, vector<128x512xbf16>
    %cst_31 = arith.constant dense<0.000000e+00> : vector<8x512xf32>
    %67 = tpu.matmul %65, %66, %cst_31 {dimension_numbers = #tpu.dot_dimension_numbers<[1], [0], [0], [1], [0, 0, 1, 1], [], []>} : vector<8x128xbf16>, vector<128x512xbf16>, vector<8x512xf32> -> vector<8x512xf32>
    %68 = arith.addf %64, %67 : vector<8x512xf32>
    %69 = arith.addf %68, %5 : vector<8x512xf32>
    %70 = vector.extract_strided_slice %69 {offsets = [0, 0], sizes = [8, 384], strides = [1, 1]} : vector<8x512xf32> to vector<8x384xf32>
    %71 = arith.negf %70 : vector<8x384xf32>
    %72 = math.exp %71 : vector<8x384xf32>
    %cst_32 = arith.constant 1.000000e+00 : f32
    %73 = vector.broadcast %cst_32 : f32 to vector<8x384xf32>
    %74 = arith.addf %73, %72 : vector<8x384xf32>
    %75 = arith.divf %73, %74 : vector<8x384xf32>
    %76 = vector.extract_strided_slice %75 {offsets = [0, 0], sizes = [8, 128], strides = [1, 1]} : vector<8x384xf32> to vector<8x128xf32>
    %77 = vector.extract_strided_slice %75 {offsets = [0, 128], sizes = [8, 128], strides = [1, 1]} : vector<8x384xf32> to vector<8x128xf32>
    %78 = vector.extract_strided_slice %75 {offsets = [0, 256], sizes = [8, 128], strides = [1, 1]} : vector<8x384xf32> to vector<8x128xf32>
    %79 = vector.extract_strided_slice %69 {offsets = [0, 384], sizes = [8, 128], strides = [1, 1]} : vector<8x512xf32> to vector<8x128xf32>
    %80 = math.tanh %79 : vector<8x128xf32>
    %81 = arith.mulf %77, %57 : vector<8x128xf32>
    %82 = arith.mulf %76, %80 : vector<8x128xf32>
    %83 = arith.addf %81, %82 : vector<8x128xf32>
    %84 = math.tanh %83 : vector<8x128xf32>
    %85 = arith.mulf %78, %84 : vector<8x128xf32>
    %c3_i32 = arith.constant 3 : i32
    %86 = arith.index_cast %c3_i32 : i32 to index
    %c0_33 = arith.constant 0 : index
    %c0_34 = arith.constant 0 : index
    %87 = vector.load %arg2[%86, %c0_33, %c0_34] : memref<8x8x128xbf16, #tpu.memory_space<vmem>>, vector<1x8x128xbf16>
    %88 = vector.shape_cast %87 : vector<1x8x128xbf16> to vector<8x128xbf16>
    %c0_35 = arith.constant 0 : index
    %c0_36 = arith.constant 0 : index
    %89 = vector.load %arg3[%c0_35, %c0_36] : memref<128x512xbf16, #tpu.memory_space<vmem>>, vector<128x512xbf16>
    %cst_37 = arith.constant dense<0.000000e+00> : vector<8x512xf32>
    %90 = tpu.matmul %88, %89, %cst_37 {dimension_numbers = #tpu.dot_dimension_numbers<[1], [0], [0], [1], [0, 0, 1, 1], [], []>} : vector<8x128xbf16>, vector<128x512xbf16>, vector<8x512xf32> -> vector<8x512xf32>
    %91 = arith.truncf %85 : vector<8x128xf32> to vector<8x128xbf16>
    %c0_38 = arith.constant 0 : index
    %c0_39 = arith.constant 0 : index
    %92 = vector.load %arg4[%c0_38, %c0_39] : memref<128x512xbf16, #tpu.memory_space<vmem>>, vector<128x512xbf16>
    %cst_40 = arith.constant dense<0.000000e+00> : vector<8x512xf32>
    %93 = tpu.matmul %91, %92, %cst_40 {dimension_numbers = #tpu.dot_dimension_numbers<[1], [0], [0], [1], [0, 0, 1, 1], [], []>} : vector<8x128xbf16>, vector<128x512xbf16>, vector<8x512xf32> -> vector<8x512xf32>
    %94 = arith.addf %90, %93 : vector<8x512xf32>
    %95 = arith.addf %94, %5 : vector<8x512xf32>
    %96 = vector.extract_strided_slice %95 {offsets = [0, 0], sizes = [8, 384], strides = [1, 1]} : vector<8x512xf32> to vector<8x384xf32>
    %97 = arith.negf %96 : vector<8x384xf32>
    %98 = math.exp %97 : vector<8x384xf32>
    %cst_41 = arith.constant 1.000000e+00 : f32
    %99 = vector.broadcast %cst_41 : f32 to vector<8x384xf32>
    %100 = arith.addf %99, %98 : vector<8x384xf32>
    %101 = arith.divf %99, %100 : vector<8x384xf32>
    %102 = vector.extract_strided_slice %101 {offsets = [0, 0], sizes = [8, 128], strides = [1, 1]} : vector<8x384xf32> to vector<8x128xf32>
    %103 = vector.extract_strided_slice %101 {offsets = [0, 128], sizes = [8, 128], strides = [1, 1]} : vector<8x384xf32> to vector<8x128xf32>
    %104 = vector.extract_strided_slice %101 {offsets = [0, 256], sizes = [8, 128], strides = [1, 1]} : vector<8x384xf32> to vector<8x128xf32>
    %105 = vector.extract_strided_slice %95 {offsets = [0, 384], sizes = [8, 128], strides = [1, 1]} : vector<8x512xf32> to vector<8x128xf32>
    %106 = math.tanh %105 : vector<8x128xf32>
    %107 = arith.mulf %103, %83 : vector<8x128xf32>
    %108 = arith.mulf %102, %106 : vector<8x128xf32>
    %109 = arith.addf %107, %108 : vector<8x128xf32>
    %110 = math.tanh %109 : vector<8x128xf32>
    %111 = arith.mulf %104, %110 : vector<8x128xf32>
    %c4_i32 = arith.constant 4 : i32
    %112 = arith.index_cast %c4_i32 : i32 to index
    %c0_42 = arith.constant 0 : index
    %c0_43 = arith.constant 0 : index
    %113 = vector.load %arg2[%112, %c0_42, %c0_43] : memref<8x8x128xbf16, #tpu.memory_space<vmem>>, vector<1x8x128xbf16>
    %114 = vector.shape_cast %113 : vector<1x8x128xbf16> to vector<8x128xbf16>
    %c0_44 = arith.constant 0 : index
    %c0_45 = arith.constant 0 : index
    %115 = vector.load %arg3[%c0_44, %c0_45] : memref<128x512xbf16, #tpu.memory_space<vmem>>, vector<128x512xbf16>
    %cst_46 = arith.constant dense<0.000000e+00> : vector<8x512xf32>
    %116 = tpu.matmul %114, %115, %cst_46 {dimension_numbers = #tpu.dot_dimension_numbers<[1], [0], [0], [1], [0, 0, 1, 1], [], []>} : vector<8x128xbf16>, vector<128x512xbf16>, vector<8x512xf32> -> vector<8x512xf32>
    %117 = arith.truncf %111 : vector<8x128xf32> to vector<8x128xbf16>
    %c0_47 = arith.constant 0 : index
    %c0_48 = arith.constant 0 : index
    %118 = vector.load %arg4[%c0_47, %c0_48] : memref<128x512xbf16, #tpu.memory_space<vmem>>, vector<128x512xbf16>
    %cst_49 = arith.constant dense<0.000000e+00> : vector<8x512xf32>
    %119 = tpu.matmul %117, %118, %cst_49 {dimension_numbers = #tpu.dot_dimension_numbers<[1], [0], [0], [1], [0, 0, 1, 1], [], []>} : vector<8x128xbf16>, vector<128x512xbf16>, vector<8x512xf32> -> vector<8x512xf32>
    %120 = arith.addf %116, %119 : vector<8x512xf32>
    %121 = arith.addf %120, %5 : vector<8x512xf32>
    %122 = vector.extract_strided_slice %121 {offsets = [0, 0], sizes = [8, 384], strides = [1, 1]} : vector<8x512xf32> to vector<8x384xf32>
    %123 = arith.negf %122 : vector<8x384xf32>
    %124 = math.exp %123 : vector<8x384xf32>
    %cst_50 = arith.constant 1.000000e+00 : f32
    %125 = vector.broadcast %cst_50 : f32 to vector<8x384xf32>
    %126 = arith.addf %125, %124 : vector<8x384xf32>
    %127 = arith.divf %125, %126 : vector<8x384xf32>
    %128 = vector.extract_strided_slice %127 {offsets = [0, 0], sizes = [8, 128], strides = [1, 1]} : vector<8x384xf32> to vector<8x128xf32>
    %129 = vector.extract_strided_slice %127 {offsets = [0, 128], sizes = [8, 128], strides = [1, 1]} : vector<8x384xf32> to vector<8x128xf32>
    %130 = vector.extract_strided_slice %127 {offsets = [0, 256], sizes = [8, 128], strides = [1, 1]} : vector<8x384xf32> to vector<8x128xf32>
    %131 = vector.extract_strided_slice %121 {offsets = [0, 384], sizes = [8, 128], strides = [1, 1]} : vector<8x512xf32> to vector<8x128xf32>
    %132 = math.tanh %131 : vector<8x128xf32>
    %133 = arith.mulf %129, %109 : vector<8x128xf32>
    %134 = arith.mulf %128, %132 : vector<8x128xf32>
    %135 = arith.addf %133, %134 : vector<8x128xf32>
    %136 = math.tanh %135 : vector<8x128xf32>
    %137 = arith.mulf %130, %136 : vector<8x128xf32>
    %c5_i32 = arith.constant 5 : i32
    %138 = arith.index_cast %c5_i32 : i32 to index
    %c0_51 = arith.constant 0 : index
    %c0_52 = arith.constant 0 : index
    %139 = vector.load %arg2[%138, %c0_51, %c0_52] : memref<8x8x128xbf16, #tpu.memory_space<vmem>>, vector<1x8x128xbf16>
    %140 = vector.shape_cast %139 : vector<1x8x128xbf16> to vector<8x128xbf16>
    %c0_53 = arith.constant 0 : index
    %c0_54 = arith.constant 0 : index
    %141 = vector.load %arg3[%c0_53, %c0_54] : memref<128x512xbf16, #tpu.memory_space<vmem>>, vector<128x512xbf16>
    %cst_55 = arith.constant dense<0.000000e+00> : vector<8x512xf32>
    %142 = tpu.matmul %140, %141, %cst_55 {dimension_numbers = #tpu.dot_dimension_numbers<[1], [0], [0], [1], [0, 0, 1, 1], [], []>} : vector<8x128xbf16>, vector<128x512xbf16>, vector<8x512xf32> -> vector<8x512xf32>
    %143 = arith.truncf %137 : vector<8x128xf32> to vector<8x128xbf16>
    %c0_56 = arith.constant 0 : index
    %c0_57 = arith.constant 0 : index
    %144 = vector.load %arg4[%c0_56, %c0_57] : memref<128x512xbf16, #tpu.memory_space<vmem>>, vector<128x512xbf16>
    %cst_58 = arith.constant dense<0.000000e+00> : vector<8x512xf32>
    %145 = tpu.matmul %143, %144, %cst_58 {dimension_numbers = #tpu.dot_dimension_numbers<[1], [0], [0], [1], [0, 0, 1, 1], [], []>} : vector<8x128xbf16>, vector<128x512xbf16>, vector<8x512xf32> -> vector<8x512xf32>
    %146 = arith.addf %142, %145 : vector<8x512xf32>
    %147 = arith.addf %146, %5 : vector<8x512xf32>
    %148 = vector.extract_strided_slice %147 {offsets = [0, 0], sizes = [8, 384], strides = [1, 1]} : vector<8x512xf32> to vector<8x384xf32>
    %149 = arith.negf %148 : vector<8x384xf32>
    %150 = math.exp %149 : vector<8x384xf32>
    %cst_59 = arith.constant 1.000000e+00 : f32
    %151 = vector.broadcast %cst_59 : f32 to vector<8x384xf32>
    %152 = arith.addf %151, %150 : vector<8x384xf32>
    %153 = arith.divf %151, %152 : vector<8x384xf32>
    %154 = vector.extract_strided_slice %153 {offsets = [0, 0], sizes = [8, 128], strides = [1, 1]} : vector<8x384xf32> to vector<8x128xf32>
    %155 = vector.extract_strided_slice %153 {offsets = [0, 128], sizes = [8, 128], strides = [1, 1]} : vector<8x384xf32> to vector<8x128xf32>
    %156 = vector.extract_strided_slice %153 {offsets = [0, 256], sizes = [8, 128], strides = [1, 1]} : vector<8x384xf32> to vector<8x128xf32>
    %157 = vector.extract_strided_slice %147 {offsets = [0, 384], sizes = [8, 128], strides = [1, 1]} : vector<8x512xf32> to vector<8x128xf32>
    %158 = math.tanh %157 : vector<8x128xf32>
    %159 = arith.mulf %155, %135 : vector<8x128xf32>
    %160 = arith.mulf %154, %158 : vector<8x128xf32>
    %161 = arith.addf %159, %160 : vector<8x128xf32>
    %162 = math.tanh %161 : vector<8x128xf32>
    %163 = arith.mulf %156, %162 : vector<8x128xf32>
    %c6_i32 = arith.constant 6 : i32
    %164 = arith.index_cast %c6_i32 : i32 to index
    %c0_60 = arith.constant 0 : index
    %c0_61 = arith.constant 0 : index
    %165 = vector.load %arg2[%164, %c0_60, %c0_61] : memref<8x8x128xbf16, #tpu.memory_space<vmem>>, vector<1x8x128xbf16>
    %166 = vector.shape_cast %165 : vector<1x8x128xbf16> to vector<8x128xbf16>
    %c0_62 = arith.constant 0 : index
    %c0_63 = arith.constant 0 : index
    %167 = vector.load %arg3[%c0_62, %c0_63] : memref<128x512xbf16, #tpu.memory_space<vmem>>, vector<128x512xbf16>
    %cst_64 = arith.constant dense<0.000000e+00> : vector<8x512xf32>
    %168 = tpu.matmul %166, %167, %cst_64 {dimension_numbers = #tpu.dot_dimension_numbers<[1], [0], [0], [1], [0, 0, 1, 1], [], []>} : vector<8x128xbf16>, vector<128x512xbf16>, vector<8x512xf32> -> vector<8x512xf32>
    %169 = arith.truncf %163 : vector<8x128xf32> to vector<8x128xbf16>
    %c0_65 = arith.constant 0 : index
    %c0_66 = arith.constant 0 : index
    %170 = vector.load %arg4[%c0_65, %c0_66] : memref<128x512xbf16, #tpu.memory_space<vmem>>, vector<128x512xbf16>
    %cst_67 = arith.constant dense<0.000000e+00> : vector<8x512xf32>
    %171 = tpu.matmul %169, %170, %cst_67 {dimension_numbers = #tpu.dot_dimension_numbers<[1], [0], [0], [1], [0, 0, 1, 1], [], []>} : vector<8x128xbf16>, vector<128x512xbf16>, vector<8x512xf32> -> vector<8x512xf32>
    %172 = arith.addf %168, %171 : vector<8x512xf32>
    %173 = arith.addf %172, %5 : vector<8x512xf32>
    %174 = vector.extract_strided_slice %173 {offsets = [0, 0], sizes = [8, 384], strides = [1, 1]} : vector<8x512xf32> to vector<8x384xf32>
    %175 = arith.negf %174 : vector<8x384xf32>
    %176 = math.exp %175 : vector<8x384xf32>
    %cst_68 = arith.constant 1.000000e+00 : f32
    %177 = vector.broadcast %cst_68 : f32 to vector<8x384xf32>
    %178 = arith.addf %177, %176 : vector<8x384xf32>
    %179 = arith.divf %177, %178 : vector<8x384xf32>
    %180 = vector.extract_strided_slice %179 {offsets = [0, 0], sizes = [8, 128], strides = [1, 1]} : vector<8x384xf32> to vector<8x128xf32>
    %181 = vector.extract_strided_slice %179 {offsets = [0, 128], sizes = [8, 128], strides = [1, 1]} : vector<8x384xf32> to vector<8x128xf32>
    %182 = vector.extract_strided_slice %179 {offsets = [0, 256], sizes = [8, 128], strides = [1, 1]} : vector<8x384xf32> to vector<8x128xf32>
    %183 = vector.extract_strided_slice %173 {offsets = [0, 384], sizes = [8, 128], strides = [1, 1]} : vector<8x512xf32> to vector<8x128xf32>
    %184 = math.tanh %183 : vector<8x128xf32>
    %185 = arith.mulf %181, %161 : vector<8x128xf32>
    %186 = arith.mulf %180, %184 : vector<8x128xf32>
    %187 = arith.addf %185, %186 : vector<8x128xf32>
    %188 = math.tanh %187 : vector<8x128xf32>
    %189 = arith.mulf %182, %188 : vector<8x128xf32>
    %c7_i32 = arith.constant 7 : i32
    %190 = arith.index_cast %c7_i32 : i32 to index
    %c0_69 = arith.constant 0 : index
    %c0_70 = arith.constant 0 : index
    %191 = vector.load %arg2[%190, %c0_69, %c0_70] : memref<8x8x128xbf16, #tpu.memory_space<vmem>>, vector<1x8x128xbf16>
    %192 = vector.shape_cast %191 : vector<1x8x128xbf16> to vector<8x128xbf16>
    %c0_71 = arith.constant 0 : index
    %c0_72 = arith.constant 0 : index
    %193 = vector.load %arg3[%c0_71, %c0_72] : memref<128x512xbf16, #tpu.memory_space<vmem>>, vector<128x512xbf16>
    %cst_73 = arith.constant dense<0.000000e+00> : vector<8x512xf32>
    %194 = tpu.matmul %192, %193, %cst_73 {dimension_numbers = #tpu.dot_dimension_numbers<[1], [0], [0], [1], [0, 0, 1, 1], [], []>} : vector<8x128xbf16>, vector<128x512xbf16>, vector<8x512xf32> -> vector<8x512xf32>
    %195 = arith.truncf %189 : vector<8x128xf32> to vector<8x128xbf16>
    %c0_74 = arith.constant 0 : index
    %c0_75 = arith.constant 0 : index
    %196 = vector.load %arg4[%c0_74, %c0_75] : memref<128x512xbf16, #tpu.memory_space<vmem>>, vector<128x512xbf16>
    %cst_76 = arith.constant dense<0.000000e+00> : vector<8x512xf32>
    %197 = tpu.matmul %195, %196, %cst_76 {dimension_numbers = #tpu.dot_dimension_numbers<[1], [0], [0], [1], [0, 0, 1, 1], [], []>} : vector<8x128xbf16>, vector<128x512xbf16>, vector<8x512xf32> -> vector<8x512xf32>
    %198 = arith.addf %194, %197 : vector<8x512xf32>
    %199 = arith.addf %198, %5 : vector<8x512xf32>
    %200 = vector.extract_strided_slice %199 {offsets = [0, 0], sizes = [8, 384], strides = [1, 1]} : vector<8x512xf32> to vector<8x384xf32>
    %201 = arith.negf %200 : vector<8x384xf32>
    %202 = math.exp %201 : vector<8x384xf32>
    %cst_77 = arith.constant 1.000000e+00 : f32
    %203 = vector.broadcast %cst_77 : f32 to vector<8x384xf32>
    %204 = arith.addf %203, %202 : vector<8x384xf32>
    %205 = arith.divf %203, %204 : vector<8x384xf32>
    %206 = vector.extract_strided_slice %205 {offsets = [0, 0], sizes = [8, 128], strides = [1, 1]} : vector<8x384xf32> to vector<8x128xf32>
    %207 = vector.extract_strided_slice %205 {offsets = [0, 128], sizes = [8, 128], strides = [1, 1]} : vector<8x384xf32> to vector<8x128xf32>
    %208 = vector.extract_strided_slice %205 {offsets = [0, 256], sizes = [8, 128], strides = [1, 1]} : vector<8x384xf32> to vector<8x128xf32>
    %209 = vector.extract_strided_slice %199 {offsets = [0, 384], sizes = [8, 128], strides = [1, 1]} : vector<8x512xf32> to vector<8x128xf32>
    %210 = math.tanh %209 : vector<8x128xf32>
    %211 = arith.mulf %207, %187 : vector<8x128xf32>
    %212 = arith.mulf %206, %210 : vector<8x128xf32>
    %213 = arith.addf %211, %212 : vector<8x128xf32>
    %214 = math.tanh %213 : vector<8x128xf32>
    %215 = arith.mulf %208, %214 : vector<8x128xf32>
    %c8_i32 = arith.constant 8 : i32
    %c0_78 = arith.constant 0 : index
    %c0_79 = arith.constant 0 : index
    %216 = vector.load %arg9[%c0_78, %c0_79] : memref<8x128xf32, #tpu.memory_space<vmem>>, vector<8x128xf32>
    tpu.vector_store %arg9[%c0_78, %c0_79], %215 {strides = array<i32>} : memref<8x128xf32, #tpu.memory_space<vmem>>, vector<8x128xf32>,
    %c0_80 = arith.constant 0 : index
    %c0_81 = arith.constant 0 : index
    %217 = vector.load %arg10[%c0_80, %c0_81] : memref<8x128xf32, #tpu.memory_space<vmem>>, vector<8x128xf32>
    tpu.vector_store %arg10[%c0_80, %c0_81], %213 {strides = array<i32>} : memref<8x128xf32, #tpu.memory_space<vmem>>, vector<8x128xf32>,
    %c0_i32_82 = arith.constant 0 : i32
    %218 = arith.cmpi eq, %arg1, %c0_i32_82 : i32
    %219 = arith.extui %218 : i1 to i32
    %c0_i32_83 = arith.constant 0 : i32
    %220 = arith.cmpi ne, %219, %c0_i32_83 : i32
    scf.if %220 {
      %221 = arith.truncf %215 : vector<8x128xf32> to vector<8x128xbf16>
      %c0_84 = arith.constant 0 : index
      %c0_85 = arith.constant 0 : index
      %222 = vector.load %arg6[%c0_84, %c0_85] : memref<128x128xbf16, #tpu.memory_space<vmem>>, vector<128x128xbf16>
      %cst_86 = arith.constant dense<0.000000e+00> : vector<8x128xf32>
      %223 = tpu.matmul %221, %222, %cst_86 {dimension_numbers = #tpu.dot_dimension_numbers<[1], [0], [0], [1], [0, 0, 1, 1], [], []>} : vector<8x128xbf16>, vector<128x128xbf16>, vector<8x128xf32> -> vector<8x128xf32>
      %c0_87 = arith.constant 0 : index
      %c0_88 = arith.constant 0 : index
      %224 = vector.load %arg7[%c0_87, %c0_88] : memref<1x128xf32, #tpu.memory_space<vmem>>, vector<1x128xf32>
      %225 = vector.broadcast %224 : vector<1x128xf32> to vector<8x128xf32>
      %226 = arith.addf %223, %225 : vector<8x128xf32>
      %c0_89 = arith.constant 0 : index
      %c0_90 = arith.constant 0 : index
      %227 = vector.load %arg8[%c0_89, %c0_90] : memref<8x128xf32, #tpu.memory_space<vmem>>, vector<8x128xf32>
      tpu.vector_store %arg8[%c0_89, %c0_90], %226 {strides = array<i32>} : memref<8x128xf32, #tpu.memory_space<vmem>>, vector<8x128xf32>,
    } else {
    }
    return
  }
  func.func @transform_0(%arg0: i32, %arg1: i32) -> (i32, i32, i32) {
    %c0_i32 = arith.constant 0 : i32
    %c0_i32_0 = arith.constant 0 : i32
    return %arg1, %arg0, %c0_i32 : i32, i32, i32
  }
  func.func @transform_1(%arg0: i32, %arg1: i32) -> (i32, i32) {
    %c0_i32 = arith.constant 0 : i32
    %c0_i32_0 = arith.constant 0 : i32
    %c0_i32_1 = arith.constant 0 : i32
    return %c0_i32, %c0_i32_0 : i32, i32
  }
  func.func @transform_2(%arg0: i32, %arg1: i32) -> (i32, i32) {
    %c0_i32 = arith.constant 0 : i32
    %c0_i32_0 = arith.constant 0 : i32
    %c0_i32_1 = arith.constant 0 : i32
    return %c0_i32, %c0_i32_0 : i32, i32
  }
  func.func @transform_3(%arg0: i32, %arg1: i32) -> (i32, i32) {
    %c0_i32 = arith.constant 0 : i32
    %c0_i32_0 = arith.constant 0 : i32
    %c0_i32_1 = arith.constant 0 : i32
    return %c0_i32, %c0_i32_0 : i32, i32
  }
  func.func @transform_4(%arg0: i32, %arg1: i32) -> (i32, i32) {
    %c0_i32 = arith.constant 0 : i32
    %c0_i32_0 = arith.constant 0 : i32
    %c0_i32_1 = arith.constant 0 : i32
    return %c0_i32, %c0_i32_0 : i32, i32
  }
  func.func @transform_5(%arg0: i32, %arg1: i32) -> (i32, i32) {
    %c0_i32 = arith.constant 0 : i32
    %c0_i32_0 = arith.constant 0 : i32
    %c0_i32_1 = arith.constant 0 : i32
    return %c0_i32, %c0_i32_0 : i32, i32
  }
  func.func @transform_6(%arg0: i32, %arg1: i32) -> (i32, i32) {
    %c0_i32 = arith.constant 0 : i32
    %c0_i32_0 = arith.constant 0 : i32
    return %arg0, %c0_i32 : i32, i32
  }
}

</mosaic_0001>

<llo_original>
// kernel: tpu_custom_call.1
$region0: #{tpu_custom_call.1}
  #allocation0 [shape = 'u32[]', space=smem, size = 0x4, offset = 0x4, fixed_abs, tag = 'smem constant byte address 0x4 - core index']
  #allocation1 [shape = 'u32[144,128]{1,0:T(1,128)}', space=vmem, size = 0x12000, scoped, tag = 'internal scratch']
  #allocation2 [shape = 'f32[8,128]{1,0:T(8,128)}', space=vmem, size = 0x1000, scoped, tag = 'scratch operand']
  #allocation3 [shape = 'f32[8,128]{1,0:T(8,128)}', space=vmem, size = 0x1000, scoped, tag = 'scratch operand']
  %s0 = inlined_call_operand.hbm [shape: bf16[8,8,128], index: 0, kind: input, shape index: {}]
  %s1 = inlined_call_operand.hbm [shape: bf16[128,512], index: 1, kind: input, shape index: {}]
  %s2 = inlined_call_operand.hbm [shape: bf16[128,512], index: 2, kind: input, shape index: {}]
  %s3 = inlined_call_operand.vmem [shape: f32[1,512], index: 3, kind: input, shape index: {}]
  %s4 = inlined_call_operand.hbm [shape: bf16[128,128], index: 4, kind: input, shape index: {}]
  %s5 = inlined_call_operand.vmem [shape: f32[1,128], index: 5, kind: input, shape index: {}]
  %s6 = inlined_call_operand.hbm [shape: f32[8,128], index: 6, kind: output, shape index: {}]
  %s7 = sld [smem:[#allocation0]]
  $region58: #{tpu_custom_call.1} parent=0
    _
  %s9 = ssub.s32 1, %s7
  %s10 = scalar_select 0, %s9, %s7
  $region1: #{tpu_custom_call.1} parent=0
    #allocation4 [shape = 'u8[16384]{0}', space=vmem, size = 0x4000, scoped, tag = 'input window, operand 0, single buffered']
    #allocation5 [shape = 's32[1]{0}', space=sflag, size = 0x4, scoped, tag = 'scoped memory for tpu_custom_call.1']
    #allocation6 [shape = 's32[1]{0}', space=sflag, size = 0x4, scoped, tag = 'scoped memory for tpu_custom_call.1']
    #allocation7 [shape = 'u8[131072]{0}', space=vmem, size = 0x20000, scoped, tag = 'input window, operand 1, single buffered']
    #allocation8 [shape = 's32[1]{0}', space=sflag, size = 0x4, scoped, tag = 'scoped memory for tpu_custom_call.1']
    #allocation9 [shape = 'u8[131072]{0}', space=vmem, size = 0x20000, scoped, tag = 'input window, operand 2, single buffered']
    #allocation10 [shape = 'u8[32768]{0}', space=vmem, size = 0x8000, scoped, tag = 'input window, operand 4, single buffered']
    #allocation11 [shape = 's32[1]{0}', space=sflag, size = 0x4, scoped, tag = 'scoped memory for tpu_custom_call.1']
    #allocation12 [shape = 'u8[4096]{0}', space=vmem, size = 0x1000, scoped, tag = 'output window, operand 0, single buffered']
    %11 = vsyncpa [#allocation5], 0
    %12 = vsyncpa [#allocation8], 0
    %13 = vsyncpa [#allocation11], 0
    %14 = vsyncpa [#allocation6], 0
    // Predicated region
    $region2: #{tpu_custom_call.1} parent=1 // pred_check
      _
    $region3: #{tpu_custom_call.1} parent=1 // pred_check_branch
      %16 = sbr.rel (0) target = $region5
    $region4: #{tpu_custom_call.1} parent=1 // pred_region
      %s18 = ssub.s32 512, 512
      %19 = vsyncadd [#allocation5], %s18
      %s20 = sshll.u32 [#allocation4], 4
      %s21 = int_to_ptr.vmem [resolvable:$true] %s20
      %26 = dma.hbm_to_vmem [thread:$0]  %s0, 512, %s21, [#allocation5], 64, 64, 4
    $region5: #{tpu_custom_call.1} parent=1 // pred_fallthru
      _
    // Predicated region
    $region6: #{tpu_custom_call.1} parent=1 // pred_check
      _
    $region7: #{tpu_custom_call.1} parent=1 // pred_check_branch
      %28 = sbr.rel (0) target = $region9
    $region8: #{tpu_custom_call.1} parent=1 // pred_region
      %s30 = ssub.s32 4096, 4096
      %31 = vsyncadd [#allocation8], %s30
      %s32 = sshll.u32 [#allocation7], 4
      %s33 = int_to_ptr.vmem [resolvable:$true] %s32
      %38 = dma.hbm_to_vmem [thread:$0]  %s1, 4096, %s33, [#allocation8], 256, 256, 16
    $region9: #{tpu_custom_call.1} parent=1 // pred_fallthru
      _
    // Predicated region
    $region10: #{tpu_custom_call.1} parent=1 // pred_check
      _
    $region11: #{tpu_custom_call.1} parent=1 // pred_check_branch
      %40 = sbr.rel (0) target = $region13
    $region12: #{tpu_custom_call.1} parent=1 // pred_region
      %s42 = ssub.s32 4096, 4096
      %43 = vsyncadd [#allocation8], %s42
      %s44 = sshll.u32 [#allocation9], 4
      %s45 = int_to_ptr.vmem [resolvable:$true] %s44
      %50 = dma.hbm_to_vmem [thread:$0]  %s2, 4096, %s45, [#allocation8], 256, 256, 16
    $region13: #{tpu_custom_call.1} parent=1 // pred_fallthru
      _
    // Predicated region
    $region14: #{tpu_custom_call.1} parent=1 // pred_check
      _
    $region15: #{tpu_custom_call.1} parent=1 // pred_check_branch
      %52 = sbr.rel (0) target = $region17
    $region16: #{tpu_custom_call.1} parent=1 // pred_region
      _
    $region17: #{tpu_custom_call.1} parent=1 // pred_fallthru
      _
    // Predicated region
    $region18: #{tpu_custom_call.1} parent=1 // pred_check
      _
    $region19: #{tpu_custom_call.1} parent=1 // pred_check_branch
      %54 = sbr.rel (0) target = $region21
    $region20: #{tpu_custom_call.1} parent=1 // pred_region
      %s56 = ssub.s32 1024, 1024
      %57 = vsyncadd [#allocation11], %s56
      %s58 = sshll.u32 [#allocation10], 4
      %s59 = int_to_ptr.vmem [resolvable:$true] %s58
      %64 = dma.hbm_to_vmem [thread:$0]  %s4, 1024, %s59, [#allocation11], 64, 64, 4
    $region21: #{tpu_custom_call.1} parent=1 // pred_fallthru
      _
    // Predicated region
    $region22: #{tpu_custom_call.1} parent=1 // pred_check
      _
    $region23: #{tpu_custom_call.1} parent=1 // pred_check_branch
      %66 = sbr.rel (0) target = $region25
    $region24: #{tpu_custom_call.1} parent=1 // pred_region
      _
    $region25: #{tpu_custom_call.1} parent=1 // pred_fallthru
      _
    // Predicated region
    $region26: #{tpu_custom_call.1} parent=1 // pred_check
      _
    $region27: #{tpu_custom_call.1} parent=1 // pred_check_branch
      %68 = sbr.rel (0) target = $region29
    $region28: #{tpu_custom_call.1} parent=1 // pred_region
      %69 = dma.done [#allocation5], 512
    $region29: #{tpu_custom_call.1} parent=1 // pred_fallthru
      _
    // Predicated region
    $region30: #{tpu_custom_call.1} parent=1 // pred_check
      _
    $region31: #{tpu_custom_call.1} parent=1 // pred_check_branch
      %71 = sbr.rel (0) target = $region33
    $region32: #{tpu_custom_call.1} parent=1 // pred_region
      %72 = dma.done [#allocation8], 4096
    $region33: #{tpu_custom_call.1} parent=1 // pred_fallthru
      _
    // Predicated region
    $region34: #{tpu_custom_call.1} parent=1 // pred_check
      _
    $region35: #{tpu_custom_call.1} parent=1 // pred_check_branch
      %74 = sbr.rel (0) target = $region37
    $region36: #{tpu_custom_call.1} parent=1 // pred_region
      %75 = dma.done [#allocation8], 4096
    $region37: #{tpu_custom_call.1} parent=1 // pred_fallthru
      _
    // Predicated region
    $region38: #{tpu_custom_call.1} parent=1 // pred_check
      _
    $region39: #{tpu_custom_call.1} parent=1 // pred_check_branch
      %77 = sbr.rel (0) target = $region41
    $region40: #{tpu_custom_call.1} parent=1 // pred_region
      %78 = dma.done [#allocation11], 1024
    $region41: #{tpu_custom_call.1} parent=1 // pred_fallthru
      _
    %p80 = scmp.eq.s32.totalorder 0, 0
    // Predicated region
    $region42: #{tpu_custom_call.1} parent=1 // pred_check
      %p81 = pneg %p80
    $region43: #{tpu_custom_call.1} parent=1 // pred_check_branch
      %83 = sbr.rel (%p81) target = $region45
    $region44: #{tpu_custom_call.1} parent=1 // pred_region
      %84 = vst [vmem:[#allocation2] sm:$0xff] 0.0
      %85 = vst [vmem:[#allocation3] sm:$0xff] 0.0
    $region45: #{tpu_custom_call.1} parent=1 // pred_fallthru
      _
    %v86 = vld [vmem:[%s3] sm:$0xf]
    %v88 = vlaneseq
    %v89 = vshrl.u32 %v88, 7
    %v90 = vsub.s32 0, %v89
    %v91 = vrot.slane %v86, %v90
    %v92 = vlaneseq
    %v93 = vshrl.u32 %v92, 7
    %v94 = vsub.s32 1, %v93
    %v95 = vrot.slane %v86, %v94
    %v96 = vlaneseq
    %v97 = vshrl.u32 %v96, 7
    %v98 = vsub.s32 2, %v97
    %v99 = vrot.slane %v86, %v98
    %v100 = vlaneseq
    %v101 = vshrl.u32 %v100, 7
    %v102 = vsub.s32 3, %v101
    %v103 = vrot.slane %v86, %v102
    %v108 = vld [vmem:[#allocation2] sm:$0xff]
    %v109 = vld [vmem:[#allocation3] sm:$0xff]
    %v110 = vld [vmem:[#allocation4] sm:$0xf]
    %v111 = vld [vmem:[#allocation7] sm:$0xff]
    %v112 = vld [vmem:[#allocation7 + $0x8] sm:$0xff]
    %v113 = vld [vmem:[#allocation7 + $0x10] sm:$0xff]
    %v114 = vld [vmem:[#allocation7 + $0x18] sm:$0xff]
    %v115 = vld [vmem:[#allocation7 + $0x20] sm:$0xff]
    %v116 = vld [vmem:[#allocation7 + $0x28] sm:$0xff]
    %v117 = vld [vmem:[#allocation7 + $0x30] sm:$0xff]
    %v118 = vld [vmem:[#allocation7 + $0x38] sm:$0xff]
    %v119 = vld [vmem:[#allocation7 + $0x40] sm:$0xff]
    %v120 = vld [vmem:[#allocation7 + $0x48] sm:$0xff]
    %v121 = vld [vmem:[#allocation7 + $0x50] sm:$0xff]
    %v122 = vld [vmem:[#allocation7 + $0x58] sm:$0xff]
    %v123 = vld [vmem:[#allocation7 + $0x60] sm:$0xff]
    %v124 = vld [vmem:[#allocation7 + $0x68] sm:$0xff]
    %v125 = vld [vmem:[#allocation7 + $0x70] sm:$0xff]
    %v126 = vld [vmem:[#allocation7 + $0x78] sm:$0xff]
    %v127 = vld [vmem:[#allocation7 + $0x80] sm:$0xff]
    %v128 = vld [vmem:[#allocation7 + $0x88] sm:$0xff]
    %v129 = vld [vmem:[#allocation7 + $0x90] sm:$0xff]
    %v130 = vld [vmem:[#allocation7 + $0x98] sm:$0xff]
    %v131 = vld [vmem:[#allocation7 + $0xa0] sm:$0xff]
    %v132 = vld [vmem:[#allocation7 + $0xa8] sm:$0xff]
    %v133 = vld [vmem:[#allocation7 + $0xb0] sm:$0xff]
    %v134 = vld [vmem:[#allocation7 + $0xb8] sm:$0xff]
    %v135 = vld [vmem:[#allocation7 + $0xc0] sm:$0xff]
    %v136 = vld [vmem:[#allocation7 + $0xc8] sm:$0xff]
    %v137 = vld [vmem:[#allocation7 + $0xd0] sm:$0xff]
    %v138 = vld [vmem:[#allocation7 + $0xd8] sm:$0xff]
    %v139 = vld [vmem:[#allocation7 + $0xe0] sm:$0xff]
    %v140 = vld [vmem:[#allocation7 + $0xe8] sm:$0xff]
    %v141 = vld [vmem:[#allocation7 + $0xf0] sm:$0xff]
    %v142 = vld [vmem:[#allocation7 + $0xf8] sm:$0xff]
    %v143 = vpack.c.bf16 %v108, %v108
    %v144 = vld [vmem:[#allocation9] sm:$0xff]
    %v145 = vld [vmem:[#allocation9 + $0x8] sm:$0xff]
    %v146 = vld [vmem:[#allocation9 + $0x10] sm:$0xff]
    %v147 = vld [vmem:[#allocation9 + $0x18] sm:$0xff]
    %v148 = vld [vmem:[#allocation9 + $0x20] sm:$0xff]
    %v149 = vld [vmem:[#allocation9 + $0x28] sm:$0xff]
    %v150 = vld [vmem:[#allocation9 + $0x30] sm:$0xff]
    %v151 = vld [vmem:[#allocation9 + $0x38] sm:$0xff]
    %v152 = vld [vmem:[#allocation9 + $0x40] sm:$0xff]
    %v153 = vld [vmem:[#allocation9 + $0x48] sm:$0xff]
    %v154 = vld [vmem:[#allocation9 + $0x50] sm:$0xff]
    %v155 = vld [vmem:[#allocation9 + $0x58] sm:$0xff]
    %v156 = vld [vmem:[#allocation9 + $0x60] sm:$0xff]
    %v157 = vld [vmem:[#allocation9 + $0x68] sm:$0xff]
    %v158 = vld [vmem:[#allocation9 + $0x70] sm:$0xff]
    %v159 = vld [vmem:[#allocation9 + $0x78] sm:$0xff]
    %v160 = vld [vmem:[#allocation9 + $0x80] sm:$0xff]
    %v161 = vld [vmem:[#allocation9 + $0x88] sm:$0xff]
    %v162 = vld [vmem:[#allocation9 + $0x90] sm:$0xff]
    %v163 = vld [vmem:[#allocation9 + $0x98] sm:$0xff]
    %v164 = vld [vmem:[#allocation9 + $0xa0] sm:$0xff]
    %v165 = vld [vmem:[#allocation9 + $0xa8] sm:$0xff]
    %v166 = vld [vmem:[#allocation9 + $0xb0] sm:$0xff]
    %v167 = vld [vmem:[#allocation9 + $0xb8] sm:$0xff]
    %v168 = vld [vmem:[#allocation9 + $0xc0] sm:$0xff]
    %v169 = vld [vmem:[#allocation9 + $0xc8] sm:$0xff]
    %v170 = vld [vmem:[#allocation9 + $0xd0] sm:$0xff]
    %v171 = vld [vmem:[#allocation9 + $0xd8] sm:$0xff]
    %v172 = vld [vmem:[#allocation9 + $0xe0] sm:$0xff]
    %v173 = vld [vmem:[#allocation9 + $0xe8] sm:$0xff]
    %v174 = vld [vmem:[#allocation9 + $0xf0] sm:$0xff]
    %v175 = vld [vmem:[#allocation9 + $0xf8] sm:$0xff]
    %v208 = vunpack.c.l.b16 %v144
    %v209 = vunpack.c.h.b16 %v144
    %v210 = vunpack.c.l.b16 %v145
    %v211 = vunpack.c.h.b16 %v145
    %v212 = vunpack.c.l.b16 %v146
    %v213 = vunpack.c.h.b16 %v146
    %v214 = vunpack.c.l.b16 %v147
    %v215 = vunpack.c.h.b16 %v147
    %v216 = vunpack.c.l.b16 %v148
    %v217 = vunpack.c.h.b16 %v148
    %v218 = vunpack.c.l.b16 %v149
    %v219 = vunpack.c.h.b16 %v149
    %v220 = vunpack.c.l.b16 %v150
    %v221 = vunpack.c.h.b16 %v150
    %v222 = vunpack.c.l.b16 %v151
    %v223 = vunpack.c.h.b16 %v151
    %v224 = vunpack.c.l.b16 %v152
    %v225 = vunpack.c.h.b16 %v152
    %v226 = vunpack.c.l.b16 %v153
    %v227 = vunpack.c.h.b16 %v153
    %v228 = vunpack.c.l.b16 %v154
    %v229 = vunpack.c.h.b16 %v154
    %v230 = vunpack.c.l.b16 %v155
    %v231 = vunpack.c.h.b16 %v155
    %v232 = vunpack.c.l.b16 %v156
    %v233 = vunpack.c.h.b16 %v156
    %v234 = vunpack.c.l.b16 %v157
    %v235 = vunpack.c.h.b16 %v157
    %v236 = vunpack.c.l.b16 %v158
    %v237 = vunpack.c.h.b16 %v158
    %v238 = vunpack.c.l.b16 %v159
    %v239 = vunpack.c.h.b16 %v159
    %v240 = vunpack.c.l.b16 %v160
    %v241 = vunpack.c.h.b16 %v160
    %v242 = vunpack.c.l.b16 %v161
    %v243 = vunpack.c.h.b16 %v161
    %v244 = vunpack.c.l.b16 %v162
    %v245 = vunpack.c.h.b16 %v162
    %v246 = vunpack.c.l.b16 %v163
    %v247 = vunpack.c.h.b16 %v163
    %v248 = vunpack.c.l.b16 %v164
    %v249 = vunpack.c.h.b16 %v164
    %v250 = vunpack.c.l.b16 %v165
    %v251 = vunpack.c.h.b16 %v165
    %v252 = vunpack.c.l.b16 %v166
    %v253 = vunpack.c.h.b16 %v166
    %v254 = vunpack.c.l.b16 %v167
    %v255 = vunpack.c.h.b16 %v167
    %v256 = vunpack.c.l.b16 %v168
    %v257 = vunpack.c.h.b16 %v168
    %v258 = vunpack.c.l.b16 %v169
    %v259 = vunpack.c.h.b16 %v169
    %v260 = vunpack.c.l.b16 %v170
    %v261 = vunpack.c.h.b16 %v170
    %v262 = vunpack.c.l.b16 %v171
    %v263 = vunpack.c.h.b16 %v171
    %v264 = vunpack.c.l.b16 %v172
    %v265 = vunpack.c.h.b16 %v172
    %v266 = vunpack.c.l.b16 %v173
    %v267 = vunpack.c.h.b16 %v173
    %v268 = vunpack.c.l.b16 %v174
    %v269 = vunpack.c.h.b16 %v174
    %v270 = vunpack.c.l.b16 %v175
    %v271 = vunpack.c.h.b16 %v175
    %v272 = vpack.c.b16 %v212, %v208
    %v273 = vpack.c.b16 %v213, %v209
    %v274 = vpack.c.b16 %v214, %v210
    %v275 = vpack.c.b16 %v215, %v211
    %v276 = vpack.c.b16 %v220, %v216
    %v277 = vpack.c.b16 %v221, %v217
    %v278 = vpack.c.b16 %v222, %v218
    %v279 = vpack.c.b16 %v223, %v219
    %v280 = vpack.c.b16 %v228, %v224
    %v281 = vpack.c.b16 %v229, %v225
    %v282 = vpack.c.b16 %v230, %v226
    %v283 = vpack.c.b16 %v231, %v227
    %v284 = vpack.c.b16 %v236, %v232
    %v285 = vpack.c.b16 %v237, %v233
    %v286 = vpack.c.b16 %v238, %v234
    %v287 = vpack.c.b16 %v239, %v235
    %v288 = vpack.c.b16 %v244, %v240
    %v289 = vpack.c.b16 %v245, %v241
    %v290 = vpack.c.b16 %v246, %v242
    %v291 = vpack.c.b16 %v247, %v243
    %v292 = vpack.c.b16 %v252, %v248
    %v293 = vpack.c.b16 %v253, %v249
    %v294 = vpack.c.b16 %v254, %v250
    %v295 = vpack.c.b16 %v255, %v251
    %v296 = vpack.c.b16 %v260, %v256
    %v297 = vpack.c.b16 %v261, %v257
    %v298 = vpack.c.b16 %v262, %v258
    %v299 = vpack.c.b16 %v263, %v259
    %v300 = vpack.c.b16 %v268, %v264
    %v301 = vpack.c.b16 %v269, %v265
    %v302 = vpack.c.b16 %v270, %v266
    %v303 = vpack.c.b16 %v271, %v267
    %336 = vmatprep.subr.bf16.mxu0 %v273
    %337 = vmatpush1.bf16.msra.mxu0 %v272
    %338 = vmatprep.subr.bf16.mxu0 %v277
    %339 = vmatpush1.bf16.msra.mxu0 %v276
    %340 = vmatprep.subr.bf16.mxu0 %v281
    %341 = vmatpush1.bf16.msra.mxu0 %v280
    %342 = vmatprep.subr.bf16.mxu0 %v285
    %343 = vmatpush1.bf16.msra.mxu0 %v284
    %344 = vmatprep.subr.bf16.mxu0 %v289
    %345 = vmatpush1.bf16.msra.mxu0 %v288
    %346 = vmatprep.subr.bf16.mxu0 %v293
    %347 = vmatpush1.bf16.msra.mxu0 %v292
    %348 = vmatprep.subr.bf16.mxu0 %v297
    %349 = vmatpush1.bf16.msra.mxu0 %v296
    %350 = vmatprep.subr.bf16.mxu0 %v301
    %351 = vmatpush1.bf16.msra.mxu0 %v300
    %352 = vmatprep.subr.bf16.mxu0 0
    %353 = vmatpush1.bf16.msra.mxu0 0
    %354 = vmatprep.subr.bf16.mxu0 0
    %355 = vmatpush1.bf16.msra.mxu0 0
    %356 = vmatprep.subr.bf16.mxu0 0
    %357 = vmatpush1.bf16.msra.mxu0 0
    %358 = vmatprep.subr.bf16.mxu0 0
    %359 = vmatpush1.bf16.msra.mxu0 0
    %360 = vmatprep.subr.bf16.mxu0 0
    %361 = vmatpush1.bf16.msra.mxu0 0
    %362 = vmatprep.subr.bf16.mxu0 0
    %363 = vmatpush1.bf16.msra.mxu0 0
    %364 = vmatprep.subr.bf16.mxu0 0
    %365 = vmatpush1.bf16.msra.mxu0 0
    %366 = vmatprep.subr.bf16.mxu0 0
    %367 = vmatpush1.bf16.msra.mxu0 0
    %368 = vmatprep.mubr.bf16.mxu0 0
    %369 = vmatmul.mubr.bf16.gmra.mrb[0].mxu0 %v143
    %v370 = vpop.f32.mrb[0].mxu0
    %v371 = vadd.f32 0.0, %v370
    %v372 = vpop.f32.mrb[0].mxu0
    %v373 = vadd.f32 0.0, %v372
    %v374 = vpop.f32.mrb[0].mxu0
    %v375 = vpop.f32.mrb[0].mxu0
    %376 = vdwg.mxu0
    %377 = vmatprep.subr.bf16.mxu0 %v275
    %378 = vmatpush1.bf16.msra.mxu0 %v274
    %379 = vmatprep.subr.bf16.mxu0 %v279
    %380 = vmatpush1.bf16.msra.mxu0 %v278
    %381 = vmatprep.subr.bf16.mxu0 %v283
    %382 = vmatpush1.bf16.msra.mxu0 %v282
    %383 = vmatprep.subr.bf16.mxu0 %v287
    %384 = vmatpush1.bf16.msra.mxu0 %v286
    %385 = vmatprep.subr.bf16.mxu0 %v291
    %386 = vmatpush1.bf16.msra.mxu0 %v290
    %387 = vmatprep.subr.bf16.mxu0 %v295
    %388 = vmatpush1.bf16.msra.mxu0 %v294
    %389 = vmatprep.subr.bf16.mxu0 %v299
    %390 = vmatpush1.bf16.msra.mxu0 %v298
    %391 = vmatprep.subr.bf16.mxu0 %v303
    %392 = vmatpush1.bf16.msra.mxu0 %v302
    %393 = vmatprep.subr.bf16.mxu0 0
    %394 = vmatpush1.bf16.msra.mxu0 0
    %395 = vmatprep.subr.bf16.mxu0 0
    %396 = vmatpush1.bf16.msra.mxu0 0
    %397 = vmatprep.subr.bf16.mxu0 0
    %398 = vmatpush1.bf16.msra.mxu0 0
    %399 = vmatprep.subr.bf16.mxu0 0
    %400 = vmatpush1.bf16.msra.mxu0 0
    %401 = vmatprep.subr.bf16.mxu0 0
    %402 = vmatpush1.bf16.msra.mxu0 0
    %403 = vmatprep.subr.bf16.mxu0 0
    %404 = vmatpush1.bf16.msra.mxu0 0
    %405 = vmatprep.subr.bf16.mxu0 0
    %406 = vmatpush1.bf16.msra.mxu0 0
    %407 = vmatprep.subr.bf16.mxu0 0
    %408 = vmatpush1.bf16.msra.mxu0 0
    %409 = vmatprep.mubr.bf16.mxu0 0
    %410 = vmatmul.mubr.bf16.gmra.mrb[0].mxu0 %v143
    %v411 = vpop.f32.mrb[0].mxu0
    %v412 = vadd.f32 0.0, %v411
    %v413 = vpop.f32.mrb[0].mxu0
    %v414 = vadd.f32 0.0, %v413
    %v415 = vpop.f32.mrb[0].mxu0
    %v416 = vpop.f32.mrb[0].mxu0
    %417 = vdwg.mxu0
    %v450 = vunpack.c.l.b16 %v111
    %v451 = vunpack.c.h.b16 %v111
    %v452 = vunpack.c.l.b16 %v112
    %v453 = vunpack.c.h.b16 %v112
    %v454 = vunpack.c.l.b16 %v113
    %v455 = vunpack.c.h.b16 %v113
    %v456 = vunpack.c.l.b16 %v114
    %v457 = vunpack.c.h.b16 %v114
    %v458 = vunpack.c.l.b16 %v115
    %v459 = vunpack.c.h.b16 %v115
    %v460 = vunpack.c.l.b16 %v116
    %v461 = vunpack.c.h.b16 %v116
    %v462 = vunpack.c.l.b16 %v117
    %v463 = vunpack.c.h.b16 %v117
    %v464 = vunpack.c.l.b16 %v118
    %v465 = vunpack.c.h.b16 %v118
    %v466 = vunpack.c.l.b16 %v119
    %v467 = vunpack.c.h.b16 %v119
    %v468 = vunpack.c.l.b16 %v120
    %v469 = vunpack.c.h.b16 %v120
    %v470 = vunpack.c.l.b16 %v121
    %v471 = vunpack.c.h.b16 %v121
    %v472 = vunpack.c.l.b16 %v122
    %v473 = vunpack.c.h.b16 %v122
    %v474 = vunpack.c.l.b16 %v123
    %v475 = vunpack.c.h.b16 %v123
    %v476 = vunpack.c.l.b16 %v124
    %v477 = vunpack.c.h.b16 %v124
    %v478 = vunpack.c.l.b16 %v125
    %v479 = vunpack.c.h.b16 %v125
    %v480 = vunpack.c.l.b16 %v126
    %v481 = vunpack.c.h.b16 %v126
    %v482 = vunpack.c.l.b16 %v127
    %v483 = vunpack.c.h.b16 %v127
    %v484 = vunpack.c.l.b16 %v128
    %v485 = vunpack.c.h.b16 %v128
    %v486 = vunpack.c.l.b16 %v129
    %v487 = vunpack.c.h.b16 %v129
    %v488 = vunpack.c.l.b16 %v130
    %v489 = vunpack.c.h.b16 %v130
    %v490 = vunpack.c.l.b16 %v131
    %v491 = vunpack.c.h.b16 %v131
    %v492 = vunpack.c.l.b16 %v132
    %v493 = vunpack.c.h.b16 %v132
    %v494 = vunpack.c.l.b16 %v133
    %v495 = vunpack.c.h.b16 %v133
    %v496 = vunpack.c.l.b16 %v134
    %v497 = vunpack.c.h.b16 %v134
    %v498 = vunpack.c.l.b16 %v135
    %v499 = vunpack.c.h.b16 %v135
    %v500 = vunpack.c.l.b16 %v136
    %v501 = vunpack.c.h.b16 %v136
    %v502 = vunpack.c.l.b16 %v137
    %v503 = vunpack.c.h.b16 %v137
    %v504 = vunpack.c.l.b16 %v138
    %v505 = vunpack.c.h.b16 %v138
    %v506 = vunpack.c.l.b16 %v139
    %v507 = vunpack.c.h.b16 %v139
    %v508 = vunpack.c.l.b16 %v140
    %v509 = vunpack.c.h.b16 %v140
    %v510 = vunpack.c.l.b16 %v141
    %v511 = vunpack.c.h.b16 %v141
    %v512 = vunpack.c.l.b16 %v142
    %v513 = vunpack.c.h.b16 %v142
    %v514 = vpack.c.b16 %v454, %v450
    %v515 = vpack.c.b16 %v455, %v451
    %v516 = vpack.c.b16 %v456, %v452
    %v517 = vpack.c.b16 %v457, %v453
    %v518 = vpack.c.b16 %v462, %v458
    %v519 = vpack.c.b16 %v463, %v459
    %v520 = vpack.c.b16 %v464, %v460
    %v521 = vpack.c.b16 %v465, %v461
    %v522 = vpack.c.b16 %v470, %v466
    %v523 = vpack.c.b16 %v471, %v467
    %v524 = vpack.c.b16 %v472, %v468
    %v525 = vpack.c.b16 %v473, %v469
    %v526 = vpack.c.b16 %v478, %v474
    %v527 = vpack.c.b16 %v479, %v475
    %v528 = vpack.c.b16 %v480, %v476
    %v529 = vpack.c.b16 %v481, %v477
    %v530 = vpack.c.b16 %v486, %v482
    %v531 = vpack.c.b16 %v487, %v483
    %v532 = vpack.c.b16 %v488, %v484
    %v533 = vpack.c.b16 %v489, %v485
    %v534 = vpack.c.b16 %v494, %v490
    %v535 = vpack.c.b16 %v495, %v491
    %v536 = vpack.c.b16 %v496, %v492
    %v537 = vpack.c.b16 %v497, %v493
    %v538 = vpack.c.b16 %v502, %v498
    %v539 = vpack.c.b16 %v503, %v499
    %v540 = vpack.c.b16 %v504, %v500
    %v541 = vpack.c.b16 %v505, %v501
    %v542 = vpack.c.b16 %v510, %v506
    %v543 = vpack.c.b16 %v511, %v507
    %v544 = vpack.c.b16 %v512, %v508
    %v545 = vpack.c.b16 %v513, %v509
    %578 = vmatprep.subr.bf16.mxu0 %v515
    %579 = vmatpush1.bf16.msra.mxu0 %v514
    %580 = vmatprep.subr.bf16.mxu0 %v519
    %581 = vmatpush1.bf16.msra.mxu0 %v518
    %582 = vmatprep.subr.bf16.mxu0 %v523
    %583 = vmatpush1.bf16.msra.mxu0 %v522
    %584 = vmatprep.subr.bf16.mxu0 %v527
    %585 = vmatpush1.bf16.msra.mxu0 %v526
    %586 = vmatprep.subr.bf16.mxu0 %v531
    %587 = vmatpush1.bf16.msra.mxu0 %v530
    %588 = vmatprep.subr.bf16.mxu0 %v535
    %589 = vmatpush1.bf16.msra.mxu0 %v534
    %590 = vmatprep.subr.bf16.mxu0 %v539
    %591 = vmatpush1.bf16.msra.mxu0 %v538
    %592 = vmatprep.subr.bf16.mxu0 %v543
    %593 = vmatpush1.bf16.msra.mxu0 %v542
    %594 = vmatprep.subr.bf16.mxu0 0
    %595 = vmatpush1.bf16.msra.mxu0 0
    %596 = vmatprep.subr.bf16.mxu0 0
    %597 = vmatpush1.bf16.msra.mxu0 0
    %598 = vmatprep.subr.bf16.mxu0 0
    %599 = vmatpush1.bf16.msra.mxu0 0
    %600 = vmatprep.subr.bf16.mxu0 0
    %601 = vmatpush1.bf16.msra.mxu0 0
    %602 = vmatprep.subr.bf16.mxu0 0
    %603 = vmatpush1.bf16.msra.mxu0 0
    %604 = vmatprep.subr.bf16.mxu0 0
    %605 = vmatpush1.bf16.msra.mxu0 0
    %606 = vmatprep.subr.bf16.mxu0 0
    %607 = vmatpush1.bf16.msra.mxu0 0
    %608 = vmatprep.subr.bf16.mxu0 0
    %609 = vmatpush1.bf16.msra.mxu0 0
    %610 = vmatprep.mubr.bf16.mxu0 0
    %611 = vmatmul.mubr.bf16.gmra.mrb[0].mxu0 %v110
    %v612 = vpop.f32.mrb[0].mxu0
    %v613 = vadd.f32 %v371, %v612
    %v614 = vpop.f32.mrb[0].mxu0
    %v615 = vadd.f32 %v373, %v614
    %v616 = vpop.f32.mrb[0].mxu0
    %v617 = vpop.f32.mrb[0].mxu0
    %618 = vdwg.mxu0
    %619 = vmatprep.subr.bf16.mxu0 %v517
    %620 = vmatpush1.bf16.msra.mxu0 %v516
    %621 = vmatprep.subr.bf16.mxu0 %v521
    %622 = vmatpush1.bf16.msra.mxu0 %v520
    %623 = vmatprep.subr.bf16.mxu0 %v525
    %624 = vmatpush1.bf16.msra.mxu0 %v524
    %625 = vmatprep.subr.bf16.mxu0 %v529
    %626 = vmatpush1.bf16.msra.mxu0 %v528
    %627 = vmatprep.subr.bf16.mxu0 %v533
    %628 = vmatpush1.bf16.msra.mxu0 %v532
    %629 = vmatprep.subr.bf16.mxu0 %v537
    %630 = vmatpush1.bf16.msra.mxu0 %v536
    %631 = vmatprep.subr.bf16.mxu0 %v541
    %632 = vmatpush1.bf16.msra.mxu0 %v540
    %633 = vmatprep.subr.bf16.mxu0 %v545
    %634 = vmatpush1.bf16.msra.mxu0 %v544
    %635 = vmatprep.subr.bf16.mxu0 0
    %636 = vmatpush1.bf16.msra.mxu0 0
    %637 = vmatprep.subr.bf16.mxu0 0
    %638 = vmatpush1.bf16.msra.mxu0 0
    %639 = vmatprep.subr.bf16.mxu0 0
    %640 = vmatpush1.bf16.msra.mxu0 0
    %641 = vmatprep.subr.bf16.mxu0 0
    %642 = vmatpush1.bf16.msra.mxu0 0
    %643 = vmatprep.subr.bf16.mxu0 0
    %644 = vmatpush1.bf16.msra.mxu0 0
    %645 = vmatprep.subr.bf16.mxu0 0
    %646 = vmatpush1.bf16.msra.mxu0 0
    %647 = vmatprep.subr.bf16.mxu0 0
    %648 = vmatpush1.bf16.msra.mxu0 0
    %649 = vmatprep.subr.bf16.mxu0 0
    %650 = vmatpush1.bf16.msra.mxu0 0
    %651 = vmatprep.mubr.bf16.mxu0 0
    %652 = vmatmul.mubr.bf16.gmra.mrb[0].mxu0 %v110
    %v653 = vpop.f32.mrb[0].mxu0
    %v654 = vadd.f32 %v412, %v653
    %v655 = vpop.f32.mrb[0].mxu0
    %v656 = vadd.f32 %v414, %v655
    %v657 = vpop.f32.mrb[0].mxu0
    %v658 = vpop.f32.mrb[0].mxu0
    %659 = vdwg.mxu0
    %v660 = vadd.f32 %v613, %v91
    %v661 = vadd.f32 %v615, %v95
    %v662 = vadd.f32 %v654, %v99
    %v663 = vadd.f32 %v656, %v103
    %v664 = vxor.u32 %v660, 2147483648
    %v665 = vxor.u32 %v661, 2147483648
    %v666 = vxor.u32 %v662, 2147483648
    %v667 = vmul.f32 %v664, 1.442695
    %v668 = vpow.pop %v667
    %v669 = vmul.f32 %v665, 1.442695
    %v670 = vpow.pop %v669
    %v671 = vmul.f32 %v666, 1.442695
    %v672 = vpow.pop %v671
    %v673 = vadd.f32 %v668, 1.0
    %v674 = vadd.f32 %v670, 1.0
    %v675 = vadd.f32 %v672, 1.0
    %v676 = vrcp.pop %v673
    %v677 = vmul.f32 1.0, %v676
    %v678 = vrcp.pop %v674
    %v679 = vmul.f32 1.0, %v678
    %v680 = vrcp.pop %v675
    %v681 = vmul.f32 1.0, %v680
    %v682 = vtanh.pop %v663
    %v683 = vmul.f32 %v679, %v109
    %v684 = vmul.f32 %v677, %v682
    %v685 = vadd.f32 %v683, %v684
    %v686 = vtanh.pop %v685
    %v687 = vmul.f32 %v681, %v686
    %s688 = scalar_lea.vmem [#allocation4], 4
    %v689 = vld [vmem:[%s688] sm:$0xf]
    %v690 = vpack.c.bf16 %v687, %v687
    %691 = vmatprep.subr.bf16.mxu0 %v273
    %692 = vmatpush1.bf16.msra.mxu0 %v272
    %693 = vmatprep.subr.bf16.mxu0 %v277
    %694 = vmatpush1.bf16.msra.mxu0 %v276
    %695 = vmatprep.subr.bf16.mxu0 %v281
    %696 = vmatpush1.bf16.msra.mxu0 %v280
    %697 = vmatprep.subr.bf16.mxu0 %v285
    %698 = vmatpush1.bf16.msra.mxu0 %v284
    %699 = vmatprep.subr.bf16.mxu0 %v289
    %700 = vmatpush1.bf16.msra.mxu0 %v288
    %701 = vmatprep.subr.bf16.mxu0 %v293
    %702 = vmatpush1.bf16.msra.mxu0 %v292
    %703 = vmatprep.subr.bf16.mxu0 %v297
    %704 = vmatpush1.bf16.msra.mxu0 %v296
    %705 = vmatprep.subr.bf16.mxu0 %v301
    %706 = vmatpush1.bf16.msra.mxu0 %v300
    %707 = vmatprep.subr.bf16.mxu0 0
    %708 = vmatpush1.bf16.msra.mxu0 0
    %709 = vmatprep.subr.bf16.mxu0 0
    %710 = vmatpush1.bf16.msra.mxu0 0
    %711 = vmatprep.subr.bf16.mxu0 0
    %712 = vmatpush1.bf16.msra.mxu0 0
    %713 = vmatprep.subr.bf16.mxu0 0
    %714 = vmatpush1.bf16.msra.mxu0 0
    %715 = vmatprep.subr.bf16.mxu0 0
    %716 = vmatpush1.bf16.msra.mxu0 0
    %717 = vmatprep.subr.bf16.mxu0 0
    %718 = vmatpush1.bf16.msra.mxu0 0
    %719 = vmatprep.subr.bf16.mxu0 0
    %720 = vmatpush1.bf16.msra.mxu0 0
    %721 = vmatprep.subr.bf16.mxu0 0
    %722 = vmatpush1.bf16.msra.mxu0 0
    %723 = vmatprep.mubr.bf16.mxu0 0
    %724 = vmatmul.mubr.bf16.gmra.mrb[0].mxu0 %v690
    %v725 = vpop.f32.mrb[0].mxu0
    %v726 = vadd.f32 0.0, %v725
    %v727 = vpop.f32.mrb[0].mxu0
    %v728 = vadd.f32 0.0, %v727
    %v729 = vpop.f32.mrb[0].mxu0
    %v730 = vpop.f32.mrb[0].mxu0
    %731 = vdwg.mxu0
    %732 = vmatprep.subr.bf16.mxu0 %v275
    %733 = vmatpush1.bf16.msra.mxu0 %v274
    %734 = vmatprep.subr.bf16.mxu0 %v279
    %735 = vmatpush1.bf16.msra.mxu0 %v278
    %736 = vmatprep.subr.bf16.mxu0 %v283
    %737 = vmatpush1.bf16.msra.mxu0 %v282
    %738 = vmatprep.subr.bf16.mxu0 %v287
    %739 = vmatpush1.bf16.msra.mxu0 %v286
    %740 = vmatprep.subr.bf16.mxu0 %v291
    %741 = vmatpush1.bf16.msra.mxu0 %v290
    %742 = vmatprep.subr.bf16.mxu0 %v295
    %743 = vmatpush1.bf16.msra.mxu0 %v294
    %744 = vmatprep.subr.bf16.mxu0 %v299
    %745 = vmatpush1.bf16.msra.mxu0 %v298
    %746 = vmatprep.subr.bf16.mxu0 %v303
    %747 = vmatpush1.bf16.msra.mxu0 %v302
    %748 = vmatprep.subr.bf16.mxu0 0
    %749 = vmatpush1.bf16.msra.mxu0 0
    %750 = vmatprep.subr.bf16.mxu0 0
    %751 = vmatpush1.bf16.msra.mxu0 0
    %752 = vmatprep.subr.bf16.mxu0 0
    %753 = vmatpush1.bf16.msra.mxu0 0
    %754 = vmatprep.subr.bf16.mxu0 0
    %755 = vmatpush1.bf16.msra.mxu0 0
    %756 = vmatprep.subr.bf16.mxu0 0
    %757 = vmatpush1.bf16.msra.mxu0 0
    %758 = vmatprep.subr.bf16.mxu0 0
    %759 = vmatpush1.bf16.msra.mxu0 0
    %760 = vmatprep.subr.bf16.mxu0 0
    %761 = vmatpush1.bf16.msra.mxu0 0
    %762 = vmatprep.subr.bf16.mxu0 0
    %763 = vmatpush1.bf16.msra.mxu0 0
    %764 = vmatprep.mubr.bf16.mxu0 0
    %765 = vmatmul.mubr.bf16.gmra.mrb[0].mxu0 %v690
    %v766 = vpop.f32.mrb[0].mxu0
    %v767 = vadd.f32 0.0, %v766
    %v768 = vpop.f32.mrb[0].mxu0
    %v769 = vadd.f32 0.0, %v768
    %v770 = vpop.f32.mrb[0].mxu0
    %v771 = vpop.f32.mrb[0].mxu0
    %772 = vdwg.mxu0
    %773 = vmatprep.subr.bf16.mxu0 %v515
    %774 = vmatpush1.bf16.msra.mxu0 %v514
    %775 = vmatprep.subr.bf16.mxu0 %v519
    %776 = vmatpush1.bf16.msra.mxu0 %v518
    %777 = vmatprep.subr.bf16.mxu0 %v523
    %778 = vmatpush1.bf16.msra.mxu0 %v522
    %779 = vmatprep.subr.bf16.mxu0 %v527
    %780 = vmatpush1.bf16.msra.mxu0 %v526
    %781 = vmatprep.subr.bf16.mxu0 %v531
    %782 = vmatpush1.bf16.msra.mxu0 %v530
    %783 = vmatprep.subr.bf16.mxu0 %v535
    %784 = vmatpush1.bf16.msra.mxu0 %v534
    %785 = vmatprep.subr.bf16.mxu0 %v539
    %786 = vmatpush1.bf16.msra.mxu0 %v538
    %787 = vmatprep.subr.bf16.mxu0 %v543
    %788 = vmatpush1.bf16.msra.mxu0 %v542
    %789 = vmatprep.subr.bf16.mxu0 0
    %790 = vmatpush1.bf16.msra.mxu0 0
    %791 = vmatprep.subr.bf16.mxu0 0
    %792 = vmatpush1.bf16.msra.mxu0 0
    %793 = vmatprep.subr.bf16.mxu0 0
    %794 = vmatpush1.bf16.msra.mxu0 0
    %795 = vmatprep.subr.bf16.mxu0 0
    %796 = vmatpush1.bf16.msra.mxu0 0
    %797 = vmatprep.subr.bf16.mxu0 0
    %798 = vmatpush1.bf16.msra.mxu0 0
    %799 = vmatprep.subr.bf16.mxu0 0
    %800 = vmatpush1.bf16.msra.mxu0 0
    %801 = vmatprep.subr.bf16.mxu0 0
    %802 = vmatpush1.bf16.msra.mxu0 0
    %803 = vmatprep.subr.bf16.mxu0 0
    %804 = vmatpush1.bf16.msra.mxu0 0
    %805 = vmatprep.mubr.bf16.mxu0 0
    %806 = vmatmul.mubr.bf16.gmra.mrb[0].mxu0 %v689
    %v807 = vpop.f32.mrb[0].mxu0
    %v808 = vadd.f32 %v726, %v807
    %v809 = vpop.f32.mrb[0].mxu0
    %v810 = vadd.f32 %v728, %v809
    %v811 = vpop.f32.mrb[0].mxu0
    %v812 = vpop.f32.mrb[0].mxu0
    %813 = vdwg.mxu0
    %814 = vmatprep.subr.bf16.mxu0 %v517
    %815 = vmatpush1.bf16.msra.mxu0 %v516
    %816 = vmatprep.subr.bf16.mxu0 %v521
    %817 = vmatpush1.bf16.msra.mxu0 %v520
    %818 = vmatprep.subr.bf16.mxu0 %v525
    %819 = vmatpush1.bf16.msra.mxu0 %v524
    %820 = vmatprep.subr.bf16.mxu0 %v529
    %821 = vmatpush1.bf16.msra.mxu0 %v528
    %822 = vmatprep.subr.bf16.mxu0 %v533
    %823 = vmatpush1.bf16.msra.mxu0 %v532
    %824 = vmatprep.subr.bf16.mxu0 %v537
    %825 = vmatpush1.bf16.msra.mxu0 %v536
    %826 = vmatprep.subr.bf16.mxu0 %v541
    %827 = vmatpush1.bf16.msra.mxu0 %v540
    %828 = vmatprep.subr.bf16.mxu0 %v545
    %829 = vmatpush1.bf16.msra.mxu0 %v544
    %830 = vmatprep.subr.bf16.mxu0 0
    %831 = vmatpush1.bf16.msra.mxu0 0
    %832 = vmatprep.subr.bf16.mxu0 0
    %833 = vmatpush1.bf16.msra.mxu0 0
    %834 = vmatprep.subr.bf16.mxu0 0
    %835 = vmatpush1.bf16.msra.mxu0 0
    %836 = vmatprep.subr.bf16.mxu0 0
    %837 = vmatpush1.bf16.msra.mxu0 0
    %838 = vmatprep.subr.bf16.mxu0 0
    %839 = vmatpush1.bf16.msra.mxu0 0
    %840 = vmatprep.subr.bf16.mxu0 0
    %841 = vmatpush1.bf16.msra.mxu0 0
    %842 = vmatprep.subr.bf16.mxu0 0
    %843 = vmatpush1.bf16.msra.mxu0 0
    %844 = vmatprep.subr.bf16.mxu0 0
    %845 = vmatpush1.bf16.msra.mxu0 0
    %846 = vmatprep.mubr.bf16.mxu0 0
    %847 = vmatmul.mubr.bf16.gmra.mrb[0].mxu0 %v689
    %v848 = vpop.f32.mrb[0].mxu0
    %v849 = vadd.f32 %v767, %v848
    %v850 = vpop.f32.mrb[0].mxu0
    %v851 = vadd.f32 %v769, %v850
    %v852 = vpop.f32.mrb[0].mxu0
    %v853 = vpop.f32.mrb[0].mxu0
    %854 = vdwg.mxu0
    %v855 = vadd.f32 %v808, %v91
    %v856 = vadd.f32 %v810, %v95
    %v857 = vadd.f32 %v849, %v99
    %v858 = vadd.f32 %v851, %v103
    %v859 = vxor.u32 %v855, 2147483648
    %v860 = vxor.u32 %v856, 2147483648
    %v861 = vxor.u32 %v857, 2147483648
    %v862 = vmul.f32 %v859, 1.442695
    %v863 = vpow.pop %v862
    %v864 = vmul.f32 %v860, 1.442695
    %v865 = vpow.pop %v864
    %v866 = vmul.f32 %v861, 1.442695
    %v867 = vpow.pop %v866
    %v868 = vadd.f32 %v863, 1.0
    %v869 = vadd.f32 %v865, 1.0
    %v870 = vadd.f32 %v867, 1.0
    %v871 = vrcp.pop %v868
    %v872 = vmul.f32 1.0, %v871
    %v873 = vrcp.pop %v869
    %v874 = vmul.f32 1.0, %v873
    %v875 = vrcp.pop %v870
    %v876 = vmul.f32 1.0, %v875
    %v877 = vtanh.pop %v858
    %v878 = vmul.f32 %v874, %v685
    %v879 = vmul.f32 %v872, %v877
    %v880 = vadd.f32 %v878, %v879
    %v881 = vtanh.pop %v880
    %v882 = vmul.f32 %v876, %v881
    %s883 = scalar_lea.vmem [#allocation4], 8
    %v884 = vld [vmem:[%s883] sm:$0xf]
    %v885 = vpack.c.bf16 %v882, %v882
    %886 = vmatprep.subr.bf16.mxu0 %v273
    %887 = vmatpush1.bf16.msra.mxu0 %v272
    %888 = vmatprep.subr.bf16.mxu0 %v277
    %889 = vmatpush1.bf16.msra.mxu0 %v276
    %890 = vmatprep.subr.bf16.mxu0 %v281
    %891 = vmatpush1.bf16.msra.mxu0 %v280
    %892 = vmatprep.subr.bf16.mxu0 %v285
    %893 = vmatpush1.bf16.msra.mxu0 %v284
    %894 = vmatprep.subr.bf16.mxu0 %v289
    %895 = vmatpush1.bf16.msra.mxu0 %v288
    %896 = vmatprep.subr.bf16.mxu0 %v293
    %897 = vmatpush1.bf16.msra.mxu0 %v292
    %898 = vmatprep.subr.bf16.mxu0 %v297
    %899 = vmatpush1.bf16.msra.mxu0 %v296
    %900 = vmatprep.subr.bf16.mxu0 %v301
    %901 = vmatpush1.bf16.msra.mxu0 %v300
    %902 = vmatprep.subr.bf16.mxu0 0
    %903 = vmatpush1.bf16.msra.mxu0 0
    %904 = vmatprep.subr.bf16.mxu0 0
    %905 = vmatpush1.bf16.msra.mxu0 0
    %906 = vmatprep.subr.bf16.mxu0 0
    %907 = vmatpush1.bf16.msra.mxu0 0
    %908 = vmatprep.subr.bf16.mxu0 0
    %909 = vmatpush1.bf16.msra.mxu0 0
    %910 = vmatprep.subr.bf16.mxu0 0
    %911 = vmatpush1.bf16.msra.mxu0 0
    %912 = vmatprep.subr.bf16.mxu0 0
    %913 = vmatpush1.bf16.msra.mxu0 0
    %914 = vmatprep.subr.bf16.mxu0 0
    %915 = vmatpush1.bf16.msra.mxu0 0
    %916 = vmatprep.subr.bf16.mxu0 0
    %917 = vmatpush1.bf16.msra.mxu0 0
    %918 = vmatprep.mubr.bf16.mxu0 0
    %919 = vmatmul.mubr.bf16.gmra.mrb[0].mxu0 %v885
    %v920 = vpop.f32.mrb[0].mxu0
    %v921 = vadd.f32 0.0, %v920
    %v922 = vpop.f32.mrb[0].mxu0
    %v923 = vadd.f32 0.0, %v922
    %v924 = vpop.f32.mrb[0].mxu0
    %v925 = vpop.f32.mrb[0].mxu0
    %926 = vdwg.mxu0
    %927 = vmatprep.subr.bf16.mxu0 %v275
    %928 = vmatpush1.bf16.msra.mxu0 %v274
    %929 = vmatprep.subr.bf16.mxu0 %v279
    %930 = vmatpush1.bf16.msra.mxu0 %v278
    %931 = vmatprep.subr.bf16.mxu0 %v283
    %932 = vmatpush1.bf16.msra.mxu0 %v282
    %933 = vmatprep.subr.bf16.mxu0 %v287
    %934 = vmatpush1.bf16.msra.mxu0 %v286
    %935 = vmatprep.subr.bf16.mxu0 %v291
    %936 = vmatpush1.bf16.msra.mxu0 %v290
    %937 = vmatprep.subr.bf16.mxu0 %v295
    %938 = vmatpush1.bf16.msra.mxu0 %v294
    %939 = vmatprep.subr.bf16.mxu0 %v299
    %940 = vmatpush1.bf16.msra.mxu0 %v298
    %941 = vmatprep.subr.bf16.mxu0 %v303
    %942 = vmatpush1.bf16.msra.mxu0 %v302
    %943 = vmatprep.subr.bf16.mxu0 0
    %944 = vmatpush1.bf16.msra.mxu0 0
    %945 = vmatprep.subr.bf16.mxu0 0
    %946 = vmatpush1.bf16.msra.mxu0 0
    %947 = vmatprep.subr.bf16.mxu0 0
    %948 = vmatpush1.bf16.msra.mxu0 0
    %949 = vmatprep.subr.bf16.mxu0 0
    %950 = vmatpush1.bf16.msra.mxu0 0
    %951 = vmatprep.subr.bf16.mxu0 0
    %952 = vmatpush1.bf16.msra.mxu0 0
    %953 = vmatprep.subr.bf16.mxu0 0
    %954 = vmatpush1.bf16.msra.mxu0 0
    %955 = vmatprep.subr.bf16.mxu0 0
    %956 = vmatpush1.bf16.msra.mxu0 0
    %957 = vmatprep.subr.bf16.mxu0 0
    %958 = vmatpush1.bf16.msra.mxu0 0
    %959 = vmatprep.mubr.bf16.mxu0 0
    %960 = vmatmul.mubr.bf16.gmra.mrb[0].mxu0 %v885
    %v961 = vpop.f32.mrb[0].mxu0
    %v962 = vadd.f32 0.0, %v961
    %v963 = vpop.f32.mrb[0].mxu0
    %v964 = vadd.f32 0.0, %v963
    %v965 = vpop.f32.mrb[0].mxu0
    %v966 = vpop.f32.mrb[0].mxu0
    %967 = vdwg.mxu0
    %968 = vmatprep.subr.bf16.mxu0 %v515
    %969 = vmatpush1.bf16.msra.mxu0 %v514
    %970 = vmatprep.subr.bf16.mxu0 %v519
    %971 = vmatpush1.bf16.msra.mxu0 %v518
    %972 = vmatprep.subr.bf16.mxu0 %v523
    %973 = vmatpush1.bf16.msra.mxu0 %v522
    %974 = vmatprep.subr.bf16.mxu0 %v527
    %975 = vmatpush1.bf16.msra.mxu0 %v526
    %976 = vmatprep.subr.bf16.mxu0 %v531
    %977 = vmatpush1.bf16.msra.mxu0 %v530
    %978 = vmatprep.subr.bf16.mxu0 %v535
    %979 = vmatpush1.bf16.msra.mxu0 %v534
    %980 = vmatprep.subr.bf16.mxu0 %v539
    %981 = vmatpush1.bf16.msra.mxu0 %v538
    %982 = vmatprep.subr.bf16.mxu0 %v543
    %983 = vmatpush1.bf16.msra.mxu0 %v542
    %984 = vmatprep.subr.bf16.mxu0 0
    %985 = vmatpush1.bf16.msra.mxu0 0
    %986 = vmatprep.subr.bf16.mxu0 0
    %987 = vmatpush1.bf16.msra.mxu0 0
    %988 = vmatprep.subr.bf16.mxu0 0
    %989 = vmatpush1.bf16.msra.mxu0 0
    %990 = vmatprep.subr.bf16.mxu0 0
    %991 = vmatpush1.bf16.msra.mxu0 0
    %992 = vmatprep.subr.bf16.mxu0 0
    %993 = vmatpush1.bf16.msra.mxu0 0
    %994 = vmatprep.subr.bf16.mxu0 0
    %995 = vmatpush1.bf16.msra.mxu0 0
    %996 = vmatprep.subr.bf16.mxu0 0
    %997 = vmatpush1.bf16.msra.mxu0 0
    %998 = vmatprep.subr.bf16.mxu0 0
    %999 = vmatpush1.bf16.msra.mxu0 0
    %1000 = vmatprep.mubr.bf16.mxu0 0
    %1001 = vmatmul.mubr.bf16.gmra.mrb[0].mxu0 %v884
    %v1002 = vpop.f32.mrb[0].mxu0
    %v1003 = vadd.f32 %v921, %v1002
    %v1004 = vpop.f32.mrb[0].mxu0
    %v1005 = vadd.f32 %v923, %v1004
    %v1006 = vpop.f32.mrb[0].mxu0
    %v1007 = vpop.f32.mrb[0].mxu0
    %1008 = vdwg.mxu0
    %1009 = vmatprep.subr.bf16.mxu0 %v517
    %1010 = vmatpush1.bf16.msra.mxu0 %v516
    %1011 = vmatprep.subr.bf16.mxu0 %v521
    %1012 = vmatpush1.bf16.msra.mxu0 %v520
    %1013 = vmatprep.subr.bf16.mxu0 %v525
    %1014 = vmatpush1.bf16.msra.mxu0 %v524
    %1015 = vmatprep.subr.bf16.mxu0 %v529
    %1016 = vmatpush1.bf16.msra.mxu0 %v528
    %1017 = vmatprep.subr.bf16.mxu0 %v533
    %1018 = vmatpush1.bf16.msra.mxu0 %v532
    %1019 = vmatprep.subr.bf16.mxu0 %v537
    %1020 = vmatpush1.bf16.msra.mxu0 %v536
    %1021 = vmatprep.subr.bf16.mxu0 %v541
    %1022 = vmatpush1.bf16.msra.mxu0 %v540
    %1023 = vmatprep.subr.bf16.mxu0 %v545
    %1024 = vmatpush1.bf16.msra.mxu0 %v544
    %1025 = vmatprep.subr.bf16.mxu0 0
    %1026 = vmatpush1.bf16.msra.mxu0 0
    %1027 = vmatprep.subr.bf16.mxu0 0
    %1028 = vmatpush1.bf16.msra.mxu0 0
    %1029 = vmatprep.subr.bf16.mxu0 0
    %1030 = vmatpush1.bf16.msra.mxu0 0
    %1031 = vmatprep.subr.bf16.mxu0 0
    %1032 = vmatpush1.bf16.msra.mxu0 0
    %1033 = vmatprep.subr.bf16.mxu0 0
    %1034 = vmatpush1.bf16.msra.mxu0 0
    %1035 = vmatprep.subr.bf16.mxu0 0
    %1036 = vmatpush1.bf16.msra.mxu0 0
    %1037 = vmatprep.subr.bf16.mxu0 0
    %1038 = vmatpush1.bf16.msra.mxu0 0
    %1039 = vmatprep.subr.bf16.mxu0 0
    %1040 = vmatpush1.bf16.msra.mxu0 0
    %1041 = vmatprep.mubr.bf16.mxu0 0
    %1042 = vmatmul.mubr.bf16.gmra.mrb[0].mxu0 %v884
    %v1043 = vpop.f32.mrb[0].mxu0
    %v1044 = vadd.f32 %v962, %v1043
    %v1045 = vpop.f32.mrb[0].mxu0
    %v1046 = vadd.f32 %v964, %v1045
    %v1047 = vpop.f32.mrb[0].mxu0
    %v1048 = vpop.f32.mrb[0].mxu0
    %1049 = vdwg.mxu0
    %v1050 = vadd.f32 %v1003, %v91
    %v1051 = vadd.f32 %v1005, %v95
    %v1052 = vadd.f32 %v1044, %v99
    %v1053 = vadd.f32 %v1046, %v103
    %v1054 = vxor.u32 %v1050, 2147483648
    %v1055 = vxor.u32 %v1051, 2147483648
    %v1056 = vxor.u32 %v1052, 2147483648
    %v1057 = vmul.f32 %v1054, 1.442695
    %v1058 = vpow.pop %v1057
    %v1059 = vmul.f32 %v1055, 1.442695
    %v1060 = vpow.pop %v1059
    %v1061 = vmul.f32 %v1056, 1.442695
    %v1062 = vpow.pop %v1061
    %v1063 = vadd.f32 %v1058, 1.0
    %v1064 = vadd.f32 %v1060, 1.0
    %v1065 = vadd.f32 %v1062, 1.0
    %v1066 = vrcp.pop %v1063
    %v1067 = vmul.f32 1.0, %v1066
    %v1068 = vrcp.pop %v1064
    %v1069 = vmul.f32 1.0, %v1068
    %v1070 = vrcp.pop %v1065
    %v1071 = vmul.f32 1.0, %v1070
    %v1072 = vtanh.pop %v1053
    %v1073 = vmul.f32 %v1069, %v880
    %v1074 = vmul.f32 %v1067, %v1072
    %v1075 = vadd.f32 %v1073, %v1074
    %v1076 = vtanh.pop %v1075
    %v1077 = vmul.f32 %v1071, %v1076
    %s1078 = scalar_lea.vmem [#allocation4], 12
    %v1079 = vld [vmem:[%s1078] sm:$0xf]
    %v1080 = vpack.c.bf16 %v1077, %v1077
    %1081 = vmatprep.subr.bf16.mxu0 %v273
    %1082 = vmatpush1.bf16.msra.mxu0 %v272
    %1083 = vmatprep.subr.bf16.mxu0 %v277
    %1084 = vmatpush1.bf16.msra.mxu0 %v276
    %1085 = vmatprep.subr.bf16.mxu0 %v281
    %1086 = vmatpush1.bf16.msra.mxu0 %v280
    %1087 = vmatprep.subr.bf16.mxu0 %v285
    %1088 = vmatpush1.bf16.msra.mxu0 %v284
    %1089 = vmatprep.subr.bf16.mxu0 %v289
    %1090 = vmatpush1.bf16.msra.mxu0 %v288
    %1091 = vmatprep.subr.bf16.mxu0 %v293
    %1092 = vmatpush1.bf16.msra.mxu0 %v292
    %1093 = vmatprep.subr.bf16.mxu0 %v297
    %1094 = vmatpush1.bf16.msra.mxu0 %v296
    %1095 = vmatprep.subr.bf16.mxu0 %v301
    %1096 = vmatpush1.bf16.msra.mxu0 %v300
    %1097 = vmatprep.subr.bf16.mxu0 0
    %1098 = vmatpush1.bf16.msra.mxu0 0
    %1099 = vmatprep.subr.bf16.mxu0 0
    %1100 = vmatpush1.bf16.msra.mxu0 0
    %1101 = vmatprep.subr.bf16.mxu0 0
    %1102 = vmatpush1.bf16.msra.mxu0 0
    %1103 = vmatprep.subr.bf16.mxu0 0
    %1104 = vmatpush1.bf16.msra.mxu0 0
    %1105 = vmatprep.subr.bf16.mxu0 0
    %1106 = vmatpush1.bf16.msra.mxu0 0
    %1107 = vmatprep.subr.bf16.mxu0 0
    %1108 = vmatpush1.bf16.msra.mxu0 0
    %1109 = vmatprep.subr.bf16.mxu0 0
    %1110 = vmatpush1.bf16.msra.mxu0 0
    %1111 = vmatprep.subr.bf16.mxu0 0
    %1112 = vmatpush1.bf16.msra.mxu0 0
    %1113 = vmatprep.mubr.bf16.mxu0 0
    %1114 = vmatmul.mubr.bf16.gmra.mrb[0].mxu0 %v1080
    %v1115 = vpop.f32.mrb[0].mxu0
    %v1116 = vadd.f32 0.0, %v1115
    %v1117 = vpop.f32.mrb[0].mxu0
    %v1118 = vadd.f32 0.0, %v1117
    %v1119 = vpop.f32.mrb[0].mxu0
    %v1120 = vpop.f32.mrb[0].mxu0
    %1121 = vdwg.mxu0
    %1122 = vmatprep.subr.bf16.mxu0 %v275
    %1123 = vmatpush1.bf16.msra.mxu0 %v274
    %1124 = vmatprep.subr.bf16.mxu0 %v279
    %1125 = vmatpush1.bf16.msra.mxu0 %v278
    %1126 = vmatprep.subr.bf16.mxu0 %v283
    %1127 = vmatpush1.bf16.msra.mxu0 %v282
    %1128 = vmatprep.subr.bf16.mxu0 %v287
    %1129 = vmatpush1.bf16.msra.mxu0 %v286
    %1130 = vmatprep.subr.bf16.mxu0 %v291
    %1131 = vmatpush1.bf16.msra.mxu0 %v290
    %1132 = vmatprep.subr.bf16.mxu0 %v295
    %1133 = vmatpush1.bf16.msra.mxu0 %v294
    %1134 = vmatprep.subr.bf16.mxu0 %v299
    %1135 = vmatpush1.bf16.msra.mxu0 %v298
    %1136 = vmatprep.subr.bf16.mxu0 %v303
    %1137 = vmatpush1.bf16.msra.mxu0 %v302
    %1138 = vmatprep.subr.bf16.mxu0 0
    %1139 = vmatpush1.bf16.msra.mxu0 0
    %1140 = vmatprep.subr.bf16.mxu0 0
    %1141 = vmatpush1.bf16.msra.mxu0 0
    %1142 = vmatprep.subr.bf16.mxu0 0
    %1143 = vmatpush1.bf16.msra.mxu0 0
    %1144 = vmatprep.subr.bf16.mxu0 0
    %1145 = vmatpush1.bf16.msra.mxu0 0
    %1146 = vmatprep.subr.bf16.mxu0 0
    %1147 = vmatpush1.bf16.msra.mxu0 0
    %1148 = vmatprep.subr.bf16.mxu0 0
    %1149 = vmatpush1.bf16.msra.mxu0 0
    %1150 = vmatprep.subr.bf16.mxu0 0
    %1151 = vmatpush1.bf16.msra.mxu0 0
    %1152 = vmatprep.subr.bf16.mxu0 0
    %1153 = vmatpush1.bf16.msra.mxu0 0
    %1154 = vmatprep.mubr.bf16.mxu0 0
    %1155 = vmatmul.mubr.bf16.gmra.mrb[0].mxu0 %v1080
    %v1156 = vpop.f32.mrb[0].mxu0
    %v1157 = vadd.f32 0.0, %v1156
    %v1158 = vpop.f32.mrb[0].mxu0
    %v1159 = vadd.f32 0.0, %v1158
    %v1160 = vpop.f32.mrb[0].mxu0
    %v1161 = vpop.f32.mrb[0].mxu0
    %1162 = vdwg.mxu0
    %1163 = vmatprep.subr.bf16.mxu0 %v515
    %1164 = vmatpush1.bf16.msra.mxu0 %v514
    %1165 = vmatprep.subr.bf16.mxu0 %v519
    %1166 = vmatpush1.bf16.msra.mxu0 %v518
    %1167 = vmatprep.subr.bf16.mxu0 %v523
    %1168 = vmatpush1.bf16.msra.mxu0 %v522
    %1169 = vmatprep.subr.bf16.mxu0 %v527
    %1170 = vmatpush1.bf16.msra.mxu0 %v526
    %1171 = vmatprep.subr.bf16.mxu0 %v531
    %1172 = vmatpush1.bf16.msra.mxu0 %v530
    %1173 = vmatprep.subr.bf16.mxu0 %v535
    %1174 = vmatpush1.bf16.msra.mxu0 %v534
    %1175 = vmatprep.subr.bf16.mxu0 %v539
    %1176 = vmatpush1.bf16.msra.mxu0 %v538
    %1177 = vmatprep.subr.bf16.mxu0 %v543
    %1178 = vmatpush1.bf16.msra.mxu0 %v542
    %1179 = vmatprep.subr.bf16.mxu0 0
    %1180 = vmatpush1.bf16.msra.mxu0 0
    %1181 = vmatprep.subr.bf16.mxu0 0
    %1182 = vmatpush1.bf16.msra.mxu0 0
    %1183 = vmatprep.subr.bf16.mxu0 0
    %1184 = vmatpush1.bf16.msra.mxu0 0
    %1185 = vmatprep.subr.bf16.mxu0 0
    %1186 = vmatpush1.bf16.msra.mxu0 0
    %1187 = vmatprep.subr.bf16.mxu0 0
    %1188 = vmatpush1.bf16.msra.mxu0 0
    %1189 = vmatprep.subr.bf16.mxu0 0
    %1190 = vmatpush1.bf16.msra.mxu0 0
    %1191 = vmatprep.subr.bf16.mxu0 0
    %1192 = vmatpush1.bf16.msra.mxu0 0
    %1193 = vmatprep.subr.bf16.mxu0 0
    %1194 = vmatpush1.bf16.msra.mxu0 0
    %1195 = vmatprep.mubr.bf16.mxu0 0
    %1196 = vmatmul.mubr.bf16.gmra.mrb[0].mxu0 %v1079
    %v1197 = vpop.f32.mrb[0].mxu0
    %v1198 = vadd.f32 %v1116, %v1197
    %v1199 = vpop.f32.mrb[0].mxu0
    %v1200 = vadd.f32 %v1118, %v1199
    %v1201 = vpop.f32.mrb[0].mxu0
    %v1202 = vpop.f32.mrb[0].mxu0
    %1203 = vdwg.mxu0
    %1204 = vmatprep.subr.bf16.mxu0 %v517
    %1205 = vmatpush1.bf16.msra.mxu0 %v516
    %1206 = vmatprep.subr.bf16.mxu0 %v521
    %1207 = vmatpush1.bf16.msra.mxu0 %v520
    %1208 = vmatprep.subr.bf16.mxu0 %v525
    %1209 = vmatpush1.bf16.msra.mxu0 %v524
    %1210 = vmatprep.subr.bf16.mxu0 %v529
    %1211 = vmatpush1.bf16.msra.mxu0 %v528
    %1212 = vmatprep.subr.bf16.mxu0 %v533
    %1213 = vmatpush1.bf16.msra.mxu0 %v532
    %1214 = vmatprep.subr.bf16.mxu0 %v537
    %1215 = vmatpush1.bf16.msra.mxu0 %v536
    %1216 = vmatprep.subr.bf16.mxu0 %v541
    %1217 = vmatpush1.bf16.msra.mxu0 %v540
    %1218 = vmatprep.subr.bf16.mxu0 %v545
    %1219 = vmatpush1.bf16.msra.mxu0 %v544
    %1220 = vmatprep.subr.bf16.mxu0 0
    %1221 = vmatpush1.bf16.msra.mxu0 0
    %1222 = vmatprep.subr.bf16.mxu0 0
    %1223 = vmatpush1.bf16.msra.mxu0 0
    %1224 = vmatprep.subr.bf16.mxu0 0
    %1225 = vmatpush1.bf16.msra.mxu0 0
    %1226 = vmatprep.subr.bf16.mxu0 0
    %1227 = vmatpush1.bf16.msra.mxu0 0
    %1228 = vmatprep.subr.bf16.mxu0 0
    %1229 = vmatpush1.bf16.msra.mxu0 0
    %1230 = vmatprep.subr.bf16.mxu0 0
    %1231 = vmatpush1.bf16.msra.mxu0 0
    %1232 = vmatprep.subr.bf16.mxu0 0
    %1233 = vmatpush1.bf16.msra.mxu0 0
    %1234 = vmatprep.subr.bf16.mxu0 0
    %1235 = vmatpush1.bf16.msra.mxu0 0
    %1236 = vmatprep.mubr.bf16.mxu0 0
    %1237 = vmatmul.mubr.bf16.gmra.mrb[0].mxu0 %v1079
    %v1238 = vpop.f32.mrb[0].mxu0
    %v1239 = vadd.f32 %v1157, %v1238
    %v1240 = vpop.f32.mrb[0].mxu0
    %v1241 = vadd.f32 %v1159, %v1240
    %v1242 = vpop.f32.mrb[0].mxu0
    %v1243 = vpop.f32.mrb[0].mxu0
    %1244 = vdwg.mxu0
    %v1245 = vadd.f32 %v1198, %v91
    %v1246 = vadd.f32 %v1200, %v95
    %v1247 = vadd.f32 %v1239, %v99
    %v1248 = vadd.f32 %v1241, %v103
    %v1249 = vxor.u32 %v1245, 2147483648
    %v1250 = vxor.u32 %v1246, 2147483648
    %v1251 = vxor.u32 %v1247, 2147483648
    %v1252 = vmul.f32 %v1249, 1.442695
    %v1253 = vpow.pop %v1252
    %v1254 = vmul.f32 %v1250, 1.442695
    %v1255 = vpow.pop %v1254
    %v1256 = vmul.f32 %v1251, 1.442695
    %v1257 = vpow.pop %v1256
    %v1258 = vadd.f32 %v1253, 1.0
    %v1259 = vadd.f32 %v1255, 1.0
    %v1260 = vadd.f32 %v1257, 1.0
    %v1261 = vrcp.pop %v1258
    %v1262 = vmul.f32 1.0, %v1261
    %v1263 = vrcp.pop %v1259
    %v1264 = vmul.f32 1.0, %v1263
    %v1265 = vrcp.pop %v1260
    %v1266 = vmul.f32 1.0, %v1265
    %v1267 = vtanh.pop %v1248
    %v1268 = vmul.f32 %v1264, %v1075
    %v1269 = vmul.f32 %v1262, %v1267
    %v1270 = vadd.f32 %v1268, %v1269
    %v1271 = vtanh.pop %v1270
    %v1272 = vmul.f32 %v1266, %v1271
    %s1273 = scalar_lea.vmem [#allocation4], 16
    %v1274 = vld [vmem:[%s1273] sm:$0xf]
    %v1275 = vpack.c.bf16 %v1272, %v1272
    %1276 = vmatprep.subr.bf16.mxu0 %v273
    %1277 = vmatpush1.bf16.msra.mxu0 %v272
    %1278 = vmatprep.subr.bf16.mxu0 %v277
    %1279 = vmatpush1.bf16.msra.mxu0 %v276
    %1280 = vmatprep.subr.bf16.mxu0 %v281
    %1281 = vmatpush1.bf16.msra.mxu0 %v280
    %1282 = vmatprep.subr.bf16.mxu0 %v285
    %1283 = vmatpush1.bf16.msra.mxu0 %v284
    %1284 = vmatprep.subr.bf16.mxu0 %v289
    %1285 = vmatpush1.bf16.msra.mxu0 %v288
    %1286 = vmatprep.subr.bf16.mxu0 %v293
    %1287 = vmatpush1.bf16.msra.mxu0 %v292
    %1288 = vmatprep.subr.bf16.mxu0 %v297
    %1289 = vmatpush1.bf16.msra.mxu0 %v296
    %1290 = vmatprep.subr.bf16.mxu0 %v301
    %1291 = vmatpush1.bf16.msra.mxu0 %v300
    %1292 = vmatprep.subr.bf16.mxu0 0
    %1293 = vmatpush1.bf16.msra.mxu0 0
    %1294 = vmatprep.subr.bf16.mxu0 0
    %1295 = vmatpush1.bf16.msra.mxu0 0
    %1296 = vmatprep.subr.bf16.mxu0 0
    %1297 = vmatpush1.bf16.msra.mxu0 0
    %1298 = vmatprep.subr.bf16.mxu0 0
    %1299 = vmatpush1.bf16.msra.mxu0 0
    %1300 = vmatprep.subr.bf16.mxu0 0
    %1301 = vmatpush1.bf16.msra.mxu0 0
    %1302 = vmatprep.subr.bf16.mxu0 0
    %1303 = vmatpush1.bf16.msra.mxu0 0
    %1304 = vmatprep.subr.bf16.mxu0 0
    %1305 = vmatpush1.bf16.msra.mxu0 0
    %1306 = vmatprep.subr.bf16.mxu0 0
    %1307 = vmatpush1.bf16.msra.mxu0 0
    %1308 = vmatprep.mubr.bf16.mxu0 0
    %1309 = vmatmul.mubr.bf16.gmra.mrb[0].mxu0 %v1275
    %v1310 = vpop.f32.mrb[0].mxu0
    %v1311 = vadd.f32 0.0, %v1310
    %v1312 = vpop.f32.mrb[0].mxu0
    %v1313 = vadd.f32 0.0, %v1312
    %v1314 = vpop.f32.mrb[0].mxu0
    %v1315 = vpop.f32.mrb[0].mxu0
    %1316 = vdwg.mxu0
    %1317 = vmatprep.subr.bf16.mxu0 %v275
    %1318 = vmatpush1.bf16.msra.mxu0 %v274
    %1319 = vmatprep.subr.bf16.mxu0 %v279
    %1320 = vmatpush1.bf16.msra.mxu0 %v278
    %1321 = vmatprep.subr.bf16.mxu0 %v283
    %1322 = vmatpush1.bf16.msra.mxu0 %v282
    %1323 = vmatprep.subr.bf16.mxu0 %v287
    %1324 = vmatpush1.bf16.msra.mxu0 %v286
    %1325 = vmatprep.subr.bf16.mxu0 %v291
    %1326 = vmatpush1.bf16.msra.mxu0 %v290
    %1327 = vmatprep.subr.bf16.mxu0 %v295
    %1328 = vmatpush1.bf16.msra.mxu0 %v294
    %1329 = vmatprep.subr.bf16.mxu0 %v299
    %1330 = vmatpush1.bf16.msra.mxu0 %v298
    %1331 = vmatprep.subr.bf16.mxu0 %v303
    %1332 = vmatpush1.bf16.msra.mxu0 %v302
    %1333 = vmatprep.subr.bf16.mxu0 0
    %1334 = vmatpush1.bf16.msra.mxu0 0
    %1335 = vmatprep.subr.bf16.mxu0 0
    %1336 = vmatpush1.bf16.msra.mxu0 0
    %1337 = vmatprep.subr.bf16.mxu0 0
    %1338 = vmatpush1.bf16.msra.mxu0 0
    %1339 = vmatprep.subr.bf16.mxu0 0
    %1340 = vmatpush1.bf16.msra.mxu0 0
    %1341 = vmatprep.subr.bf16.mxu0 0
    %1342 = vmatpush1.bf16.msra.mxu0 0
    %1343 = vmatprep.subr.bf16.mxu0 0
    %1344 = vmatpush1.bf16.msra.mxu0 0
    %1345 = vmatprep.subr.bf16.mxu0 0
    %1346 = vmatpush1.bf16.msra.mxu0 0
    %1347 = vmatprep.subr.bf16.mxu0 0
    %1348 = vmatpush1.bf16.msra.mxu0 0
    %1349 = vmatprep.mubr.bf16.mxu0 0
    %1350 = vmatmul.mubr.bf16.gmra.mrb[0].mxu0 %v1275
    %v1351 = vpop.f32.mrb[0].mxu0
    %v1352 = vadd.f32 0.0, %v1351
    %v1353 = vpop.f32.mrb[0].mxu0
    %v1354 = vadd.f32 0.0, %v1353
    %v1355 = vpop.f32.mrb[0].mxu0
    %v1356 = vpop.f32.mrb[0].mxu0
    %1357 = vdwg.mxu0
    %1358 = vmatprep.subr.bf16.mxu0 %v515
    %1359 = vmatpush1.bf16.msra.mxu0 %v514
    %1360 = vmatprep.subr.bf16.mxu0 %v519
    %1361 = vmatpush1.bf16.msra.mxu0 %v518
    %1362 = vmatprep.subr.bf16.mxu0 %v523
    %1363 = vmatpush1.bf16.msra.mxu0 %v522
    %1364 = vmatprep.subr.bf16.mxu0 %v527
    %1365 = vmatpush1.bf16.msra.mxu0 %v526
    %1366 = vmatprep.subr.bf16.mxu0 %v531
    %1367 = vmatpush1.bf16.msra.mxu0 %v530
    %1368 = vmatprep.subr.bf16.mxu0 %v535
    %1369 = vmatpush1.bf16.msra.mxu0 %v534
    %1370 = vmatprep.subr.bf16.mxu0 %v539
    %1371 = vmatpush1.bf16.msra.mxu0 %v538
    %1372 = vmatprep.subr.bf16.mxu0 %v543
    %1373 = vmatpush1.bf16.msra.mxu0 %v542
    %1374 = vmatprep.subr.bf16.mxu0 0
    %1375 = vmatpush1.bf16.msra.mxu0 0
    %1376 = vmatprep.subr.bf16.mxu0 0
    %1377 = vmatpush1.bf16.msra.mxu0 0
    %1378 = vmatprep.subr.bf16.mxu0 0
    %1379 = vmatpush1.bf16.msra.mxu0 0
    %1380 = vmatprep.subr.bf16.mxu0 0
    %1381 = vmatpush1.bf16.msra.mxu0 0
    %1382 = vmatprep.subr.bf16.mxu0 0
    %1383 = vmatpush1.bf16.msra.mxu0 0
    %1384 = vmatprep.subr.bf16.mxu0 0
    %1385 = vmatpush1.bf16.msra.mxu0 0
    %1386 = vmatprep.subr.bf16.mxu0 0
    %1387 = vmatpush1.bf16.msra.mxu0 0
    %1388 = vmatprep.subr.bf16.mxu0 0
    %1389 = vmatpush1.bf16.msra.mxu0 0
    %1390 = vmatprep.mubr.bf16.mxu0 0
    %1391 = vmatmul.mubr.bf16.gmra.mrb[0].mxu0 %v1274
    %v1392 = vpop.f32.mrb[0].mxu0
    %v1393 = vadd.f32 %v1311, %v1392
    %v1394 = vpop.f32.mrb[0].mxu0
    %v1395 = vadd.f32 %v1313, %v1394
    %v1396 = vpop.f32.mrb[0].mxu0
    %v1397 = vpop.f32.mrb[0].mxu0
    %1398 = vdwg.mxu0
    %1399 = vmatprep.subr.bf16.mxu0 %v517
    %1400 = vmatpush1.bf16.msra.mxu0 %v516
    %1401 = vmatprep.subr.bf16.mxu0 %v521
    %1402 = vmatpush1.bf16.msra.mxu0 %v520
    %1403 = vmatprep.subr.bf16.mxu0 %v525
    %1404 = vmatpush1.bf16.msra.mxu0 %v524
    %1405 = vmatprep.subr.bf16.mxu0 %v529
    %1406 = vmatpush1.bf16.msra.mxu0 %v528
    %1407 = vmatprep.subr.bf16.mxu0 %v533
    %1408 = vmatpush1.bf16.msra.mxu0 %v532
    %1409 = vmatprep.subr.bf16.mxu0 %v537
    %1410 = vmatpush1.bf16.msra.mxu0 %v536
    %1411 = vmatprep.subr.bf16.mxu0 %v541
    %1412 = vmatpush1.bf16.msra.mxu0 %v540
    %1413 = vmatprep.subr.bf16.mxu0 %v545
    %1414 = vmatpush1.bf16.msra.mxu0 %v544
    %1415 = vmatprep.subr.bf16.mxu0 0
    %1416 = vmatpush1.bf16.msra.mxu0 0
    %1417 = vmatprep.subr.bf16.mxu0 0
    %1418 = vmatpush1.bf16.msra.mxu0 0
    %1419 = vmatprep.subr.bf16.mxu0 0
    %1420 = vmatpush1.bf16.msra.mxu0 0
    %1421 = vmatprep.subr.bf16.mxu0 0
    %1422 = vmatpush1.bf16.msra.mxu0 0
    %1423 = vmatprep.subr.bf16.mxu0 0
    %1424 = vmatpush1.bf16.msra.mxu0 0
    %1425 = vmatprep.subr.bf16.mxu0 0
    %1426 = vmatpush1.bf16.msra.mxu0 0
    %1427 = vmatprep.subr.bf16.mxu0 0
    %1428 = vmatpush1.bf16.msra.mxu0 0
    %1429 = vmatprep.subr.bf16.mxu0 0
    %1430 = vmatpush1.bf16.msra.mxu0 0
    %1431 = vmatprep.mubr.bf16.mxu0 0
    %1432 = vmatmul.mubr.bf16.gmra.mrb[0].mxu0 %v1274
    %v1433 = vpop.f32.mrb[0].mxu0
    %v1434 = vadd.f32 %v1352, %v1433
    %v1435 = vpop.f32.mrb[0].mxu0
    %v1436 = vadd.f32 %v1354, %v1435
    %v1437 = vpop.f32.mrb[0].mxu0
    %v1438 = vpop.f32.mrb[0].mxu0
    %1439 = vdwg.mxu0
    %v1440 = vadd.f32 %v1393, %v91
    %v1441 = vadd.f32 %v1395, %v95
    %v1442 = vadd.f32 %v1434, %v99
    %v1443 = vadd.f32 %v1436, %v103
    %v1444 = vxor.u32 %v1440, 2147483648
    %v1445 = vxor.u32 %v1441, 2147483648
    %v1446 = vxor.u32 %v1442, 2147483648
    %v1447 = vmul.f32 %v1444, 1.442695
    %v1448 = vpow.pop %v1447
    %v1449 = vmul.f32 %v1445, 1.442695
    %v1450 = vpow.pop %v1449
    %v1451 = vmul.f32 %v1446, 1.442695
    %v1452 = vpow.pop %v1451
    %v1453 = vadd.f32 %v1448, 1.0
    %v1454 = vadd.f32 %v1450, 1.0
    %v1455 = vadd.f32 %v1452, 1.0
    %v1456 = vrcp.pop %v1453
    %v1457 = vmul.f32 1.0, %v1456
    %v1458 = vrcp.pop %v1454
    %v1459 = vmul.f32 1.0, %v1458
    %v1460 = vrcp.pop %v1455
    %v1461 = vmul.f32 1.0, %v1460
    %v1462 = vtanh.pop %v1443
    %v1463 = vmul.f32 %v1459, %v1270
    %v1464 = vmul.f32 %v1457, %v1462
    %v1465 = vadd.f32 %v1463, %v1464
    %v1466 = vtanh.pop %v1465
    %v1467 = vmul.f32 %v1461, %v1466
    %s1468 = scalar_lea.vmem [#allocation4], 20
    %v1469 = vld [vmem:[%s1468] sm:$0xf]
    %v1470 = vpack.c.bf16 %v1467, %v1467
    %1471 = vmatprep.subr.bf16.mxu0 %v273
    %1472 = vmatpush1.bf16.msra.mxu0 %v272
    %1473 = vmatprep.subr.bf16.mxu0 %v277
    %1474 = vmatpush1.bf16.msra.mxu0 %v276
    %1475 = vmatprep.subr.bf16.mxu0 %v281
    %1476 = vmatpush1.bf16.msra.mxu0 %v280
    %1477 = vmatprep.subr.bf16.mxu0 %v285
    %1478 = vmatpush1.bf16.msra.mxu0 %v284
    %1479 = vmatprep.subr.bf16.mxu0 %v289
    %1480 = vmatpush1.bf16.msra.mxu0 %v288
    %1481 = vmatprep.subr.bf16.mxu0 %v293
    %1482 = vmatpush1.bf16.msra.mxu0 %v292
    %1483 = vmatprep.subr.bf16.mxu0 %v297
    %1484 = vmatpush1.bf16.msra.mxu0 %v296
    %1485 = vmatprep.subr.bf16.mxu0 %v301
    %1486 = vmatpush1.bf16.msra.mxu0 %v300
    %1487 = vmatprep.subr.bf16.mxu0 0
    %1488 = vmatpush1.bf16.msra.mxu0 0
    %1489 = vmatprep.subr.bf16.mxu0 0
    %1490 = vmatpush1.bf16.msra.mxu0 0
    %1491 = vmatprep.subr.bf16.mxu0 0
    %1492 = vmatpush1.bf16.msra.mxu0 0
    %1493 = vmatprep.subr.bf16.mxu0 0
    %1494 = vmatpush1.bf16.msra.mxu0 0
    %1495 = vmatprep.subr.bf16.mxu0 0
    %1496 = vmatpush1.bf16.msra.mxu0 0
    %1497 = vmatprep.subr.bf16.mxu0 0
    %1498 = vmatpush1.bf16.msra.mxu0 0
    %1499 = vmatprep.subr.bf16.mxu0 0
    %1500 = vmatpush1.bf16.msra.mxu0 0
    %1501 = vmatprep.subr.bf16.mxu0 0
    %1502 = vmatpush1.bf16.msra.mxu0 0
    %1503 = vmatprep.mubr.bf16.mxu0 0
    %1504 = vmatmul.mubr.bf16.gmra.mrb[0].mxu0 %v1470
    %v1505 = vpop.f32.mrb[0].mxu0
    %v1506 = vadd.f32 0.0, %v1505
    %v1507 = vpop.f32.mrb[0].mxu0
    %v1508 = vadd.f32 0.0, %v1507
    %v1509 = vpop.f32.mrb[0].mxu0
    %v1510 = vpop.f32.mrb[0].mxu0
    %1511 = vdwg.mxu0
    %1512 = vmatprep.subr.bf16.mxu0 %v275
    %1513 = vmatpush1.bf16.msra.mxu0 %v274
    %1514 = vmatprep.subr.bf16.mxu0 %v279
    %1515 = vmatpush1.bf16.msra.mxu0 %v278
    %1516 = vmatprep.subr.bf16.mxu0 %v283
    %1517 = vmatpush1.bf16.msra.mxu0 %v282
    %1518 = vmatprep.subr.bf16.mxu0 %v287
    %1519 = vmatpush1.bf16.msra.mxu0 %v286
    %1520 = vmatprep.subr.bf16.mxu0 %v291
    %1521 = vmatpush1.bf16.msra.mxu0 %v290
    %1522 = vmatprep.subr.bf16.mxu0 %v295
    %1523 = vmatpush1.bf16.msra.mxu0 %v294
    %1524 = vmatprep.subr.bf16.mxu0 %v299
    %1525 = vmatpush1.bf16.msra.mxu0 %v298
    %1526 = vmatprep.subr.bf16.mxu0 %v303
    %1527 = vmatpush1.bf16.msra.mxu0 %v302
    %1528 = vmatprep.subr.bf16.mxu0 0
    %1529 = vmatpush1.bf16.msra.mxu0 0
    %1530 = vmatprep.subr.bf16.mxu0 0
    %1531 = vmatpush1.bf16.msra.mxu0 0
    %1532 = vmatprep.subr.bf16.mxu0 0
    %1533 = vmatpush1.bf16.msra.mxu0 0
    %1534 = vmatprep.subr.bf16.mxu0 0
    %1535 = vmatpush1.bf16.msra.mxu0 0
    %1536 = vmatprep.subr.bf16.mxu0 0
    %1537 = vmatpush1.bf16.msra.mxu0 0
    %1538 = vmatprep.subr.bf16.mxu0 0
    %1539 = vmatpush1.bf16.msra.mxu0 0
    %1540 = vmatprep.subr.bf16.mxu0 0
    %1541 = vmatpush1.bf16.msra.mxu0 0
    %1542 = vmatprep.subr.bf16.mxu0 0
    %1543 = vmatpush1.bf16.msra.mxu0 0
    %1544 = vmatprep.mubr.bf16.mxu0 0
    %1545 = vmatmul.mubr.bf16.gmra.mrb[0].mxu0 %v1470
    %v1546 = vpop.f32.mrb[0].mxu0
    %v1547 = vadd.f32 0.0, %v1546
    %v1548 = vpop.f32.mrb[0].mxu0
    %v1549 = vadd.f32 0.0, %v1548
    %v1550 = vpop.f32.mrb[0].mxu0
    %v1551 = vpop.f32.mrb[0].mxu0
    %1552 = vdwg.mxu0
    %1553 = vmatprep.subr.bf16.mxu0 %v515
    %1554 = vmatpush1.bf16.msra.mxu0 %v514
    %1555 = vmatprep.subr.bf16.mxu0 %v519
    %1556 = vmatpush1.bf16.msra.mxu0 %v518
    %1557 = vmatprep.subr.bf16.mxu0 %v523
    %1558 = vmatpush1.bf16.msra.mxu0 %v522
    %1559 = vmatprep.subr.bf16.mxu0 %v527
    %1560 = vmatpush1.bf16.msra.mxu0 %v526
    %1561 = vmatprep.subr.bf16.mxu0 %v531
    %1562 = vmatpush1.bf16.msra.mxu0 %v530
    %1563 = vmatprep.subr.bf16.mxu0 %v535
    %1564 = vmatpush1.bf16.msra.mxu0 %v534
    %1565 = vmatprep.subr.bf16.mxu0 %v539
    %1566 = vmatpush1.bf16.msra.mxu0 %v538
    %1567 = vmatprep.subr.bf16.mxu0 %v543
    %1568 = vmatpush1.bf16.msra.mxu0 %v542
    %1569 = vmatprep.subr.bf16.mxu0 0
    %1570 = vmatpush1.bf16.msra.mxu0 0
    %1571 = vmatprep.subr.bf16.mxu0 0
    %1572 = vmatpush1.bf16.msra.mxu0 0
    %1573 = vmatprep.subr.bf16.mxu0 0
    %1574 = vmatpush1.bf16.msra.mxu0 0
    %1575 = vmatprep.subr.bf16.mxu0 0
    %1576 = vmatpush1.bf16.msra.mxu0 0
    %1577 = vmatprep.subr.bf16.mxu0 0
    %1578 = vmatpush1.bf16.msra.mxu0 0
    %1579 = vmatprep.subr.bf16.mxu0 0
    %1580 = vmatpush1.bf16.msra.mxu0 0
    %1581 = vmatprep.subr.bf16.mxu0 0
    %1582 = vmatpush1.bf16.msra.mxu0 0
    %1583 = vmatprep.subr.bf16.mxu0 0
    %1584 = vmatpush1.bf16.msra.mxu0 0
    %1585 = vmatprep.mubr.bf16.mxu0 0
    %1586 = vmatmul.mubr.bf16.gmra.mrb[0].mxu0 %v1469
    %v1587 = vpop.f32.mrb[0].mxu0
    %v1588 = vadd.f32 %v1506, %v1587
    %v1589 = vpop.f32.mrb[0].mxu0
    %v1590 = vadd.f32 %v1508, %v1589
    %v1591 = vpop.f32.mrb[0].mxu0
    %v1592 = vpop.f32.mrb[0].mxu0
    %1593 = vdwg.mxu0
    %1594 = vmatprep.subr.bf16.mxu0 %v517
    %1595 = vmatpush1.bf16.msra.mxu0 %v516
    %1596 = vmatprep.subr.bf16.mxu0 %v521
    %1597 = vmatpush1.bf16.msra.mxu0 %v520
    %1598 = vmatprep.subr.bf16.mxu0 %v525
    %1599 = vmatpush1.bf16.msra.mxu0 %v524
    %1600 = vmatprep.subr.bf16.mxu0 %v529
    %1601 = vmatpush1.bf16.msra.mxu0 %v528
    %1602 = vmatprep.subr.bf16.mxu0 %v533
    %1603 = vmatpush1.bf16.msra.mxu0 %v532
    %1604 = vmatprep.subr.bf16.mxu0 %v537
    %1605 = vmatpush1.bf16.msra.mxu0 %v536
    %1606 = vmatprep.subr.bf16.mxu0 %v541
    %1607 = vmatpush1.bf16.msra.mxu0 %v540
    %1608 = vmatprep.subr.bf16.mxu0 %v545
    %1609 = vmatpush1.bf16.msra.mxu0 %v544
    %1610 = vmatprep.subr.bf16.mxu0 0
    %1611 = vmatpush1.bf16.msra.mxu0 0
    %1612 = vmatprep.subr.bf16.mxu0 0
    %1613 = vmatpush1.bf16.msra.mxu0 0
    %1614 = vmatprep.subr.bf16.mxu0 0
    %1615 = vmatpush1.bf16.msra.mxu0 0
    %1616 = vmatprep.subr.bf16.mxu0 0
    %1617 = vmatpush1.bf16.msra.mxu0 0
    %1618 = vmatprep.subr.bf16.mxu0 0
    %1619 = vmatpush1.bf16.msra.mxu0 0
    %1620 = vmatprep.subr.bf16.mxu0 0
    %1621 = vmatpush1.bf16.msra.mxu0 0
    %1622 = vmatprep.subr.bf16.mxu0 0
    %1623 = vmatpush1.bf16.msra.mxu0 0
    %1624 = vmatprep.subr.bf16.mxu0 0
    %1625 = vmatpush1.bf16.msra.mxu0 0
    %1626 = vmatprep.mubr.bf16.mxu0 0
    %1627 = vmatmul.mubr.bf16.gmra.mrb[0].mxu0 %v1469
    %v1628 = vpop.f32.mrb[0].mxu0
    %v1629 = vadd.f32 %v1547, %v1628
    %v1630 = vpop.f32.mrb[0].mxu0
    %v1631 = vadd.f32 %v1549, %v1630
    %v1632 = vpop.f32.mrb[0].mxu0
    %v1633 = vpop.f32.mrb[0].mxu0
    %1634 = vdwg.mxu0
    %v1635 = vadd.f32 %v1588, %v91
    %v1636 = vadd.f32 %v1590, %v95
    %v1637 = vadd.f32 %v1629, %v99
    %v1638 = vadd.f32 %v1631, %v103
    %v1639 = vxor.u32 %v1635, 2147483648
    %v1640 = vxor.u32 %v1636, 2147483648
    %v1641 = vxor.u32 %v1637, 2147483648
    %v1642 = vmul.f32 %v1639, 1.442695
    %v1643 = vpow.pop %v1642
    %v1644 = vmul.f32 %v1640, 1.442695
    %v1645 = vpow.pop %v1644
    %v1646 = vmul.f32 %v1641, 1.442695
    %v1647 = vpow.pop %v1646
    %v1648 = vadd.f32 %v1643, 1.0
    %v1649 = vadd.f32 %v1645, 1.0
    %v1650 = vadd.f32 %v1647, 1.0
    %v1651 = vrcp.pop %v1648
    %v1652 = vmul.f32 1.0, %v1651
    %v1653 = vrcp.pop %v1649
    %v1654 = vmul.f32 1.0, %v1653
    %v1655 = vrcp.pop %v1650
    %v1656 = vmul.f32 1.0, %v1655
    %v1657 = vtanh.pop %v1638
    %v1658 = vmul.f32 %v1654, %v1465
    %v1659 = vmul.f32 %v1652, %v1657
    %v1660 = vadd.f32 %v1658, %v1659
    %v1661 = vtanh.pop %v1660
    %v1662 = vmul.f32 %v1656, %v1661
    %s1663 = scalar_lea.vmem [#allocation4], 24
    %v1664 = vld [vmem:[%s1663] sm:$0xf]
    %v1665 = vpack.c.bf16 %v1662, %v1662
    %1666 = vmatprep.subr.bf16.mxu0 %v273
    %1667 = vmatpush1.bf16.msra.mxu0 %v272
    %1668 = vmatprep.subr.bf16.mxu0 %v277
    %1669 = vmatpush1.bf16.msra.mxu0 %v276
    %1670 = vmatprep.subr.bf16.mxu0 %v281
    %1671 = vmatpush1.bf16.msra.mxu0 %v280
    %1672 = vmatprep.subr.bf16.mxu0 %v285
    %1673 = vmatpush1.bf16.msra.mxu0 %v284
    %1674 = vmatprep.subr.bf16.mxu0 %v289
    %1675 = vmatpush1.bf16.msra.mxu0 %v288
    %1676 = vmatprep.subr.bf16.mxu0 %v293
    %1677 = vmatpush1.bf16.msra.mxu0 %v292
    %1678 = vmatprep.subr.bf16.mxu0 %v297
    %1679 = vmatpush1.bf16.msra.mxu0 %v296
    %1680 = vmatprep.subr.bf16.mxu0 %v301
    %1681 = vmatpush1.bf16.msra.mxu0 %v300
    %1682 = vmatprep.subr.bf16.mxu0 0
    %1683 = vmatpush1.bf16.msra.mxu0 0
    %1684 = vmatprep.subr.bf16.mxu0 0
    %1685 = vmatpush1.bf16.msra.mxu0 0
    %1686 = vmatprep.subr.bf16.mxu0 0
    %1687 = vmatpush1.bf16.msra.mxu0 0
    %1688 = vmatprep.subr.bf16.mxu0 0
    %1689 = vmatpush1.bf16.msra.mxu0 0
    %1690 = vmatprep.subr.bf16.mxu0 0
    %1691 = vmatpush1.bf16.msra.mxu0 0
    %1692 = vmatprep.subr.bf16.mxu0 0
    %1693 = vmatpush1.bf16.msra.mxu0 0
    %1694 = vmatprep.subr.bf16.mxu0 0
    %1695 = vmatpush1.bf16.msra.mxu0 0
    %1696 = vmatprep.subr.bf16.mxu0 0
    %1697 = vmatpush1.bf16.msra.mxu0 0
    %1698 = vmatprep.mubr.bf16.mxu0 0
    %1699 = vmatmul.mubr.bf16.gmra.mrb[0].mxu0 %v1665
    %v1700 = vpop.f32.mrb[0].mxu0
    %v1701 = vadd.f32 0.0, %v1700
    %v1702 = vpop.f32.mrb[0].mxu0
    %v1703 = vadd.f32 0.0, %v1702
    %v1704 = vpop.f32.mrb[0].mxu0
    %v1705 = vpop.f32.mrb[0].mxu0
    %1706 = vdwg.mxu0
    %1707 = vmatprep.subr.bf16.mxu0 %v275
    %1708 = vmatpush1.bf16.msra.mxu0 %v274
    %1709 = vmatprep.subr.bf16.mxu0 %v279
    %1710 = vmatpush1.bf16.msra.mxu0 %v278
    %1711 = vmatprep.subr.bf16.mxu0 %v283
    %1712 = vmatpush1.bf16.msra.mxu0 %v282
    %1713 = vmatprep.subr.bf16.mxu0 %v287
    %1714 = vmatpush1.bf16.msra.mxu0 %v286
    %1715 = vmatprep.subr.bf16.mxu0 %v291
    %1716 = vmatpush1.bf16.msra.mxu0 %v290
    %1717 = vmatprep.subr.bf16.mxu0 %v295
    %1718 = vmatpush1.bf16.msra.mxu0 %v294
    %1719 = vmatprep.subr.bf16.mxu0 %v299
    %1720 = vmatpush1.bf16.msra.mxu0 %v298
    %1721 = vmatprep.subr.bf16.mxu0 %v303
    %1722 = vmatpush1.bf16.msra.mxu0 %v302
    %1723 = vmatprep.subr.bf16.mxu0 0
    %1724 = vmatpush1.bf16.msra.mxu0 0
    %1725 = vmatprep.subr.bf16.mxu0 0
    %1726 = vmatpush1.bf16.msra.mxu0 0
    %1727 = vmatprep.subr.bf16.mxu0 0
    %1728 = vmatpush1.bf16.msra.mxu0 0
    %1729 = vmatprep.subr.bf16.mxu0 0
    %1730 = vmatpush1.bf16.msra.mxu0 0
    %1731 = vmatprep.subr.bf16.mxu0 0
    %1732 = vmatpush1.bf16.msra.mxu0 0
    %1733 = vmatprep.subr.bf16.mxu0 0
    %1734 = vmatpush1.bf16.msra.mxu0 0
    %1735 = vmatprep.subr.bf16.mxu0 0
    %1736 = vmatpush1.bf16.msra.mxu0 0
    %1737 = vmatprep.subr.bf16.mxu0 0
    %1738 = vmatpush1.bf16.msra.mxu0 0
    %1739 = vmatprep.mubr.bf16.mxu0 0
    %1740 = vmatmul.mubr.bf16.gmra.mrb[0].mxu0 %v1665
    %v1741 = vpop.f32.mrb[0].mxu0
    %v1742 = vadd.f32 0.0, %v1741
    %v1743 = vpop.f32.mrb[0].mxu0
    %v1744 = vadd.f32 0.0, %v1743
    %v1745 = vpop.f32.mrb[0].mxu0
    %v1746 = vpop.f32.mrb[0].mxu0
    %1747 = vdwg.mxu0
    %1748 = vmatprep.subr.bf16.mxu0 %v515
    %1749 = vmatpush1.bf16.msra.mxu0 %v514
    %1750 = vmatprep.subr.bf16.mxu0 %v519
    %1751 = vmatpush1.bf16.msra.mxu0 %v518
    %1752 = vmatprep.subr.bf16.mxu0 %v523
    %1753 = vmatpush1.bf16.msra.mxu0 %v522
    %1754 = vmatprep.subr.bf16.mxu0 %v527
    %1755 = vmatpush1.bf16.msra.mxu0 %v526
    %1756 = vmatprep.subr.bf16.mxu0 %v531
    %1757 = vmatpush1.bf16.msra.mxu0 %v530
    %1758 = vmatprep.subr.bf16.mxu0 %v535
    %1759 = vmatpush1.bf16.msra.mxu0 %v534
    %1760 = vmatprep.subr.bf16.mxu0 %v539
    %1761 = vmatpush1.bf16.msra.mxu0 %v538
    %1762 = vmatprep.subr.bf16.mxu0 %v543
    %1763 = vmatpush1.bf16.msra.mxu0 %v542
    %1764 = vmatprep.subr.bf16.mxu0 0
    %1765 = vmatpush1.bf16.msra.mxu0 0
    %1766 = vmatprep.subr.bf16.mxu0 0
    %1767 = vmatpush1.bf16.msra.mxu0 0
    %1768 = vmatprep.subr.bf16.mxu0 0
    %1769 = vmatpush1.bf16.msra.mxu0 0
    %1770 = vmatprep.subr.bf16.mxu0 0
    %1771 = vmatpush1.bf16.msra.mxu0 0
    %1772 = vmatprep.subr.bf16.mxu0 0
    %1773 = vmatpush1.bf16.msra.mxu0 0
    %1774 = vmatprep.subr.bf16.mxu0 0
    %1775 = vmatpush1.bf16.msra.mxu0 0
    %1776 = vmatprep.subr.bf16.mxu0 0
    %1777 = vmatpush1.bf16.msra.mxu0 0
    %1778 = vmatprep.subr.bf16.mxu0 0
    %1779 = vmatpush1.bf16.msra.mxu0 0
    %1780 = vmatprep.mubr.bf16.mxu0 0
    %1781 = vmatmul.mubr.bf16.gmra.mrb[0].mxu0 %v1664
    %v1782 = vpop.f32.mrb[0].mxu0
    %v1783 = vadd.f32 %v1701, %v1782
    %v1784 = vpop.f32.mrb[0].mxu0
    %v1785 = vadd.f32 %v1703, %v1784
    %v1786 = vpop.f32.mrb[0].mxu0
    %v1787 = vpop.f32.mrb[0].mxu0
    %1788 = vdwg.mxu0
    %1789 = vmatprep.subr.bf16.mxu0 %v517
    %1790 = vmatpush1.bf16.msra.mxu0 %v516
    %1791 = vmatprep.subr.bf16.mxu0 %v521
    %1792 = vmatpush1.bf16.msra.mxu0 %v520
    %1793 = vmatprep.subr.bf16.mxu0 %v525
    %1794 = vmatpush1.bf16.msra.mxu0 %v524
    %1795 = vmatprep.subr.bf16.mxu0 %v529
    %1796 = vmatpush1.bf16.msra.mxu0 %v528
    %1797 = vmatprep.subr.bf16.mxu0 %v533
    %1798 = vmatpush1.bf16.msra.mxu0 %v532
    %1799 = vmatprep.subr.bf16.mxu0 %v537
    %1800 = vmatpush1.bf16.msra.mxu0 %v536
    %1801 = vmatprep.subr.bf16.mxu0 %v541
    %1802 = vmatpush1.bf16.msra.mxu0 %v540
    %1803 = vmatprep.subr.bf16.mxu0 %v545
    %1804 = vmatpush1.bf16.msra.mxu0 %v544
    %1805 = vmatprep.subr.bf16.mxu0 0
    %1806 = vmatpush1.bf16.msra.mxu0 0
    %1807 = vmatprep.subr.bf16.mxu0 0
    %1808 = vmatpush1.bf16.msra.mxu0 0
    %1809 = vmatprep.subr.bf16.mxu0 0
    %1810 = vmatpush1.bf16.msra.mxu0 0
    %1811 = vmatprep.subr.bf16.mxu0 0
    %1812 = vmatpush1.bf16.msra.mxu0 0
    %1813 = vmatprep.subr.bf16.mxu0 0
    %1814 = vmatpush1.bf16.msra.mxu0 0
    %1815 = vmatprep.subr.bf16.mxu0 0
    %1816 = vmatpush1.bf16.msra.mxu0 0
    %1817 = vmatprep.subr.bf16.mxu0 0
    %1818 = vmatpush1.bf16.msra.mxu0 0
    %1819 = vmatprep.subr.bf16.mxu0 0
    %1820 = vmatpush1.bf16.msra.mxu0 0
    %1821 = vmatprep.mubr.bf16.mxu0 0
    %1822 = vmatmul.mubr.bf16.gmra.mrb[0].mxu0 %v1664
    %v1823 = vpop.f32.mrb[0].mxu0
    %v1824 = vadd.f32 %v1742, %v1823
    %v1825 = vpop.f32.mrb[0].mxu0
    %v1826 = vadd.f32 %v1744, %v1825
    %v1827 = vpop.f32.mrb[0].mxu0
    %v1828 = vpop.f32.mrb[0].mxu0
    %1829 = vdwg.mxu0
    %v1830 = vadd.f32 %v1783, %v91
    %v1831 = vadd.f32 %v1785, %v95
    %v1832 = vadd.f32 %v1824, %v99
    %v1833 = vadd.f32 %v1826, %v103
    %v1834 = vxor.u32 %v1830, 2147483648
    %v1835 = vxor.u32 %v1831, 2147483648
    %v1836 = vxor.u32 %v1832, 2147483648
    %v1837 = vmul.f32 %v1834, 1.442695
    %v1838 = vpow.pop %v1837
    %v1839 = vmul.f32 %v1835, 1.442695
    %v1840 = vpow.pop %v1839
    %v1841 = vmul.f32 %v1836, 1.442695
    %v1842 = vpow.pop %v1841
    %v1843 = vadd.f32 %v1838, 1.0
    %v1844 = vadd.f32 %v1840, 1.0
    %v1845 = vadd.f32 %v1842, 1.0
    %v1846 = vrcp.pop %v1843
    %v1847 = vmul.f32 1.0, %v1846
    %v1848 = vrcp.pop %v1844
    %v1849 = vmul.f32 1.0, %v1848
    %v1850 = vrcp.pop %v1845
    %v1851 = vmul.f32 1.0, %v1850
    %v1852 = vtanh.pop %v1833
    %v1853 = vmul.f32 %v1849, %v1660
    %v1854 = vmul.f32 %v1847, %v1852
    %v1855 = vadd.f32 %v1853, %v1854
    %v1856 = vtanh.pop %v1855
    %v1857 = vmul.f32 %v1851, %v1856
    %s1858 = scalar_lea.vmem [#allocation4], 28
    %v1859 = vld [vmem:[%s1858] sm:$0xf]
    %v1860 = vpack.c.bf16 %v1857, %v1857
    %1861 = vmatprep.subr.bf16.mxu0 %v273
    %1862 = vmatpush1.bf16.msra.mxu0 %v272
    %1863 = vmatprep.subr.bf16.mxu0 %v277
    %1864 = vmatpush1.bf16.msra.mxu0 %v276
    %1865 = vmatprep.subr.bf16.mxu0 %v281
    %1866 = vmatpush1.bf16.msra.mxu0 %v280
    %1867 = vmatprep.subr.bf16.mxu0 %v285
    %1868 = vmatpush1.bf16.msra.mxu0 %v284
    %1869 = vmatprep.subr.bf16.mxu0 %v289
    %1870 = vmatpush1.bf16.msra.mxu0 %v288
    %1871 = vmatprep.subr.bf16.mxu0 %v293
    %1872 = vmatpush1.bf16.msra.mxu0 %v292
    %1873 = vmatprep.subr.bf16.mxu0 %v297
    %1874 = vmatpush1.bf16.msra.mxu0 %v296
    %1875 = vmatprep.subr.bf16.mxu0 %v301
    %1876 = vmatpush1.bf16.msra.mxu0 %v300
    %1877 = vmatprep.subr.bf16.mxu0 0
    %1878 = vmatpush1.bf16.msra.mxu0 0
    %1879 = vmatprep.subr.bf16.mxu0 0
    %1880 = vmatpush1.bf16.msra.mxu0 0
    %1881 = vmatprep.subr.bf16.mxu0 0
    %1882 = vmatpush1.bf16.msra.mxu0 0
    %1883 = vmatprep.subr.bf16.mxu0 0
    %1884 = vmatpush1.bf16.msra.mxu0 0
    %1885 = vmatprep.subr.bf16.mxu0 0
    %1886 = vmatpush1.bf16.msra.mxu0 0
    %1887 = vmatprep.subr.bf16.mxu0 0
    %1888 = vmatpush1.bf16.msra.mxu0 0
    %1889 = vmatprep.subr.bf16.mxu0 0
    %1890 = vmatpush1.bf16.msra.mxu0 0
    %1891 = vmatprep.subr.bf16.mxu0 0
    %1892 = vmatpush1.bf16.msra.mxu0 0
    %1893 = vmatprep.mubr.bf16.mxu0 0
    %1894 = vmatmul.mubr.bf16.gmra.mrb[0].mxu0 %v1860
    %v1895 = vpop.f32.mrb[0].mxu0
    %v1896 = vadd.f32 0.0, %v1895
    %v1897 = vpop.f32.mrb[0].mxu0
    %v1898 = vadd.f32 0.0, %v1897
    %v1899 = vpop.f32.mrb[0].mxu0
    %v1900 = vpop.f32.mrb[0].mxu0
    %1901 = vdwg.mxu0
    %1902 = vmatprep.subr.bf16.mxu0 %v275
    %1903 = vmatpush1.bf16.msra.mxu0 %v274
    %1904 = vmatprep.subr.bf16.mxu0 %v279
    %1905 = vmatpush1.bf16.msra.mxu0 %v278
    %1906 = vmatprep.subr.bf16.mxu0 %v283
    %1907 = vmatpush1.bf16.msra.mxu0 %v282
    %1908 = vmatprep.subr.bf16.mxu0 %v287
    %1909 = vmatpush1.bf16.msra.mxu0 %v286
    %1910 = vmatprep.subr.bf16.mxu0 %v291
    %1911 = vmatpush1.bf16.msra.mxu0 %v290
    %1912 = vmatprep.subr.bf16.mxu0 %v295
    %1913 = vmatpush1.bf16.msra.mxu0 %v294
    %1914 = vmatprep.subr.bf16.mxu0 %v299
    %1915 = vmatpush1.bf16.msra.mxu0 %v298
    %1916 = vmatprep.subr.bf16.mxu0 %v303
    %1917 = vmatpush1.bf16.msra.mxu0 %v302
    %1918 = vmatprep.subr.bf16.mxu0 0
    %1919 = vmatpush1.bf16.msra.mxu0 0
    %1920 = vmatprep.subr.bf16.mxu0 0
    %1921 = vmatpush1.bf16.msra.mxu0 0
    %1922 = vmatprep.subr.bf16.mxu0 0
    %1923 = vmatpush1.bf16.msra.mxu0 0
    %1924 = vmatprep.subr.bf16.mxu0 0
    %1925 = vmatpush1.bf16.msra.mxu0 0
    %1926 = vmatprep.subr.bf16.mxu0 0
    %1927 = vmatpush1.bf16.msra.mxu0 0
    %1928 = vmatprep.subr.bf16.mxu0 0
    %1929 = vmatpush1.bf16.msra.mxu0 0
    %1930 = vmatprep.subr.bf16.mxu0 0
    %1931 = vmatpush1.bf16.msra.mxu0 0
    %1932 = vmatprep.subr.bf16.mxu0 0
    %1933 = vmatpush1.bf16.msra.mxu0 0
    %1934 = vmatprep.mubr.bf16.mxu0 0
    %1935 = vmatmul.mubr.bf16.gmra.mrb[0].mxu0 %v1860
    %v1936 = vpop.f32.mrb[0].mxu0
    %v1937 = vadd.f32 0.0, %v1936
    %v1938 = vpop.f32.mrb[0].mxu0
    %v1939 = vadd.f32 0.0, %v1938
    %v1940 = vpop.f32.mrb[0].mxu0
    %v1941 = vpop.f32.mrb[0].mxu0
    %1942 = vdwg.mxu0
    %1943 = vmatprep.subr.bf16.mxu0 %v515
    %1944 = vmatpush1.bf16.msra.mxu0 %v514
    %1945 = vmatprep.subr.bf16.mxu0 %v519
    %1946 = vmatpush1.bf16.msra.mxu0 %v518
    %1947 = vmatprep.subr.bf16.mxu0 %v523
    %1948 = vmatpush1.bf16.msra.mxu0 %v522
    %1949 = vmatprep.subr.bf16.mxu0 %v527
    %1950 = vmatpush1.bf16.msra.mxu0 %v526
    %1951 = vmatprep.subr.bf16.mxu0 %v531
    %1952 = vmatpush1.bf16.msra.mxu0 %v530
    %1953 = vmatprep.subr.bf16.mxu0 %v535
    %1954 = vmatpush1.bf16.msra.mxu0 %v534
    %1955 = vmatprep.subr.bf16.mxu0 %v539
    %1956 = vmatpush1.bf16.msra.mxu0 %v538
    %1957 = vmatprep.subr.bf16.mxu0 %v543
    %1958 = vmatpush1.bf16.msra.mxu0 %v542
    %1959 = vmatprep.subr.bf16.mxu0 0
    %1960 = vmatpush1.bf16.msra.mxu0 0
    %1961 = vmatprep.subr.bf16.mxu0 0
    %1962 = vmatpush1.bf16.msra.mxu0 0
    %1963 = vmatprep.subr.bf16.mxu0 0
    %1964 = vmatpush1.bf16.msra.mxu0 0
    %1965 = vmatprep.subr.bf16.mxu0 0
    %1966 = vmatpush1.bf16.msra.mxu0 0
    %1967 = vmatprep.subr.bf16.mxu0 0
    %1968 = vmatpush1.bf16.msra.mxu0 0
    %1969 = vmatprep.subr.bf16.mxu0 0
    %1970 = vmatpush1.bf16.msra.mxu0 0
    %1971 = vmatprep.subr.bf16.mxu0 0
    %1972 = vmatpush1.bf16.msra.mxu0 0
    %1973 = vmatprep.subr.bf16.mxu0 0
    %1974 = vmatpush1.bf16.msra.mxu0 0
    %1975 = vmatprep.mubr.bf16.mxu0 0
    %1976 = vmatmul.mubr.bf16.gmra.mrb[0].mxu0 %v1859
    %v1977 = vpop.f32.mrb[0].mxu0
    %v1978 = vadd.f32 %v1896, %v1977
    %v1979 = vpop.f32.mrb[0].mxu0
    %v1980 = vadd.f32 %v1898, %v1979
    %v1981 = vpop.f32.mrb[0].mxu0
    %v1982 = vpop.f32.mrb[0].mxu0
    %1983 = vdwg.mxu0
    %1984 = vmatprep.subr.bf16.mxu0 %v517
    %1985 = vmatpush1.bf16.msra.mxu0 %v516
    %1986 = vmatprep.subr.bf16.mxu0 %v521
    %1987 = vmatpush1.bf16.msra.mxu0 %v520
    %1988 = vmatprep.subr.bf16.mxu0 %v525
    %1989 = vmatpush1.bf16.msra.mxu0 %v524
    %1990 = vmatprep.subr.bf16.mxu0 %v529
    %1991 = vmatpush1.bf16.msra.mxu0 %v528
    %1992 = vmatprep.subr.bf16.mxu0 %v533
    %1993 = vmatpush1.bf16.msra.mxu0 %v532
    %1994 = vmatprep.subr.bf16.mxu0 %v537
    %1995 = vmatpush1.bf16.msra.mxu0 %v536
    %1996 = vmatprep.subr.bf16.mxu0 %v541
    %1997 = vmatpush1.bf16.msra.mxu0 %v540
    %1998 = vmatprep.subr.bf16.mxu0 %v545
    %1999 = vmatpush1.bf16.msra.mxu0 %v544
    %2000 = vmatprep.subr.bf16.mxu0 0
    %2001 = vmatpush1.bf16.msra.mxu0 0
    %2002 = vmatprep.subr.bf16.mxu0 0
    %2003 = vmatpush1.bf16.msra.mxu0 0
    %2004 = vmatprep.subr.bf16.mxu0 0
    %2005 = vmatpush1.bf16.msra.mxu0 0
    %2006 = vmatprep.subr.bf16.mxu0 0
    %2007 = vmatpush1.bf16.msra.mxu0 0
    %2008 = vmatprep.subr.bf16.mxu0 0
    %2009 = vmatpush1.bf16.msra.mxu0 0
    %2010 = vmatprep.subr.bf16.mxu0 0
    %2011 = vmatpush1.bf16.msra.mxu0 0
    %2012 = vmatprep.subr.bf16.mxu0 0
    %2013 = vmatpush1.bf16.msra.mxu0 0
    %2014 = vmatprep.subr.bf16.mxu0 0
    %2015 = vmatpush1.bf16.msra.mxu0 0
    %2016 = vmatprep.mubr.bf16.mxu0 0
    %2017 = vmatmul.mubr.bf16.gmra.mrb[0].mxu0 %v1859
    %v2018 = vpop.f32.mrb[0].mxu0
    %v2019 = vadd.f32 %v1937, %v2018
    %v2020 = vpop.f32.mrb[0].mxu0
    %v2021 = vadd.f32 %v1939, %v2020
    %v2022 = vpop.f32.mrb[0].mxu0
    %v2023 = vpop.f32.mrb[0].mxu0
    %2024 = vdwg.mxu0
    %v2025 = vadd.f32 %v1978, %v91
    %v2026 = vadd.f32 %v1980, %v95
    %v2027 = vadd.f32 %v2019, %v99
    %v2028 = vadd.f32 %v2021, %v103
    %v2029 = vxor.u32 %v2025, 2147483648
    %v2030 = vxor.u32 %v2026, 2147483648
    %v2031 = vxor.u32 %v2027, 2147483648
    %v2032 = vmul.f32 %v2029, 1.442695
    %v2033 = vpow.pop %v2032
    %v2034 = vmul.f32 %v2030, 1.442695
    %v2035 = vpow.pop %v2034
    %v2036 = vmul.f32 %v2031, 1.442695
    %v2037 = vpow.pop %v2036
    %v2038 = vadd.f32 %v2033, 1.0
    %v2039 = vadd.f32 %v2035, 1.0
    %v2040 = vadd.f32 %v2037, 1.0
    %v2041 = vrcp.pop %v2038
    %v2042 = vmul.f32 1.0, %v2041
    %v2043 = vrcp.pop %v2039
    %v2044 = vmul.f32 1.0, %v2043
    %v2045 = vrcp.pop %v2040
    %v2046 = vmul.f32 1.0, %v2045
    %v2047 = vtanh.pop %v2028
    %v2048 = vmul.f32 %v2044, %v1855
    %v2049 = vmul.f32 %v2042, %v2047
    %v2050 = vadd.f32 %v2048, %v2049
    %v2051 = vtanh.pop %v2050
    %v2052 = vmul.f32 %v2046, %v2051
    %2053 = vst [vmem:[#allocation2] sm:$0xff] %v2052
    %2054 = vst [vmem:[#allocation3] sm:$0xff] %v2050
    // Predicated region
    $region46: #{tpu_custom_call.1} parent=1 // pred_check
      %p2055 = pneg %p80
    $region47: #{tpu_custom_call.1} parent=1 // pred_check_branch
      %2057 = sbr.rel (%p2055) target = $region49
    $region48: #{tpu_custom_call.1} parent=1 // pred_region
      %v2058 = vpack.c.bf16 %v2052, %v2052
      %v2059 = vld [vmem:[#allocation10] sm:$0xf]
      %v2060 = vld [vmem:[#allocation10 + $0x4] sm:$0xf]
      %v2061 = vld [vmem:[#allocation10 + $0x8] sm:$0xf]
      %v2062 = vld [vmem:[#allocation10 + $0xc] sm:$0xf]
      %v2063 = vld [vmem:[#allocation10 + $0x10] sm:$0xf]
      %v2064 = vld [vmem:[#allocation10 + $0x14] sm:$0xf]
      %v2065 = vld [vmem:[#allocation10 + $0x18] sm:$0xf]
      %v2066 = vld [vmem:[#allocation10 + $0x1c] sm:$0xf]
      %v2067 = vld [vmem:[#allocation10 + $0x20] sm:$0xf]
      %v2068 = vld [vmem:[#allocation10 + $0x24] sm:$0xf]
      %v2069 = vld [vmem:[#allocation10 + $0x28] sm:$0xf]
      %v2070 = vld [vmem:[#allocation10 + $0x2c] sm:$0xf]
      %v2071 = vld [vmem:[#allocation10 + $0x30] sm:$0xf]
      %v2072 = vld [vmem:[#allocation10 + $0x34] sm:$0xf]
      %v2073 = vld [vmem:[#allocation10 + $0x38] sm:$0xf]
      %v2074 = vld [vmem:[#allocation10 + $0x3c] sm:$0xf]
      %v2075 = vld [vmem:[%s5] sm:$0x1]
      %v2077 = vlaneseq
      %v2078 = vshrl.u32 %v2077, 7
      %v2079 = vsub.s32 0, %v2078
      %v2080 = vrot.slane %v2075, %v2079
      %v2098 = vunpack.c.l.b16 %v2059
      %v2099 = vunpack.c.l.b16 %v2060
      %v2100 = vunpack.c.l.b16 %v2061
      %v2101 = vunpack.c.l.b16 %v2062
      %v2102 = vunpack.c.l.b16 %v2063
      %v2103 = vunpack.c.l.b16 %v2064
      %v2104 = vunpack.c.l.b16 %v2065
      %v2105 = vunpack.c.l.b16 %v2066
      %v2106 = vunpack.c.l.b16 %v2067
      %v2107 = vunpack.c.l.b16 %v2068
      %v2108 = vunpack.c.l.b16 %v2069
      %v2109 = vunpack.c.l.b16 %v2070
      %v2110 = vunpack.c.l.b16 %v2071
      %v2111 = vunpack.c.l.b16 %v2072
      %v2112 = vunpack.c.l.b16 %v2073
      %v2113 = vunpack.c.l.b16 %v2074
      %v2114 = vpack.c.b16 %v2099, %v2098
      %v2115 = vpack.c.b16 %v2101, %v2100
      %v2116 = vpack.c.b16 %v2103, %v2102
      %v2117 = vpack.c.b16 %v2105, %v2104
      %v2118 = vpack.c.b16 %v2107, %v2106
      %v2119 = vpack.c.b16 %v2109, %v2108
      %v2120 = vpack.c.b16 %v2111, %v2110
      %v2121 = vpack.c.b16 %v2113, %v2112
      %2130 = vmatprep.subr.bf16.mxu0 0
      %2131 = vmatpush1.bf16.msra.mxu0 %v2114
      %2132 = vmatprep.subr.bf16.mxu0 0
      %2133 = vmatpush1.bf16.msra.mxu0 %v2115
      %2134 = vmatprep.subr.bf16.mxu0 0
      %2135 = vmatpush1.bf16.msra.mxu0 %v2116
      %2136 = vmatprep.subr.bf16.mxu0 0
      %2137 = vmatpush1.bf16.msra.mxu0 %v2117
      %2138 = vmatprep.subr.bf16.mxu0 0
      %2139 = vmatpush1.bf16.msra.mxu0 %v2118
      %2140 = vmatprep.subr.bf16.mxu0 0
      %2141 = vmatpush1.bf16.msra.mxu0 %v2119
      %2142 = vmatprep.subr.bf16.mxu0 0
      %2143 = vmatpush1.bf16.msra.mxu0 %v2120
      %2144 = vmatprep.subr.bf16.mxu0 0
      %2145 = vmatpush1.bf16.msra.mxu0 %v2121
      %2146 = vmatprep.subr.bf16.mxu0 0
      %2147 = vmatpush1.bf16.msra.mxu0 0
      %2148 = vmatprep.subr.bf16.mxu0 0
      %2149 = vmatpush1.bf16.msra.mxu0 0
      %2150 = vmatprep.subr.bf16.mxu0 0
      %2151 = vmatpush1.bf16.msra.mxu0 0
      %2152 = vmatprep.subr.bf16.mxu0 0
      %2153 = vmatpush1.bf16.msra.mxu0 0
      %2154 = vmatprep.subr.bf16.mxu0 0
      %2155 = vmatpush1.bf16.msra.mxu0 0
      %2156 = vmatprep.subr.bf16.mxu0 0
      %2157 = vmatpush1.bf16.msra.mxu0 0
      %2158 = vmatprep.subr.bf16.mxu0 0
      %2159 = vmatpush1.bf16.msra.mxu0 0
      %2160 = vmatprep.subr.bf16.mxu0 0
      %2161 = vmatpush1.bf16.msra.mxu0 0
      %2162 = vmatprep.mubr.bf16.mxu0 0
      %2163 = vmatmul.mubr.bf16.gmra.mrb[0].mxu0 %v2058
      %v2164 = vpop.f32.mrb[0].mxu0
      %v2165 = vadd.f32 %v2080, %v2164
      %v2166 = vpop.f32.mrb[0].mxu0
      %v2167 = vpop.f32.mrb[0].mxu0
      %v2168 = vpop.f32.mrb[0].mxu0
      %2169 = vdwg.mxu0
      %2170 = vst [vmem:[#allocation12] sm:$0xff] %v2165
    $region49: #{tpu_custom_call.1} parent=1 // pred_fallthru
      _
    // Predicated region
    $region50: #{tpu_custom_call.1} parent=1 // pred_check
      _
    $region51: #{tpu_custom_call.1} parent=1 // pred_check_branch
      %2172 = sbr.rel (0) target = $region53
    $region52: #{tpu_custom_call.1} parent=1 // pred_region
      %s2174 = ssub.s32 128, 128
      %2175 = vsyncadd [#allocation6], %s2174
      %s2177 = sshll.u32 [#allocation12], 4
      %s2178 = int_to_ptr.vmem [resolvable:$true] %s2177
      %2180 = dma.vmem_to_hbm [thread:$0]  %s2178, 128, %s6, [#allocation6]
    $region53: #{tpu_custom_call.1} parent=1 // pred_fallthru
      _
    // Predicated region
    $region54: #{tpu_custom_call.1} parent=1 // pred_check
      _
    $region55: #{tpu_custom_call.1} parent=1 // pred_check_branch
      %2182 = sbr.rel (0) target = $region57
    $region56: #{tpu_custom_call.1} parent=1 // pred_region
      %2183 = dma.done [#allocation6], 128
    $region57: #{tpu_custom_call.1} parent=1 // pred_fallthru
      _
    %2184 = vsyncpa [#allocation5], 1
    %2185 = vsyncpa [#allocation8], 1
    %2186 = vsyncpa [#allocation11], 1
    %2187 = vsyncpa [#allocation6], 1

</llo_original>
